<compile_context>
chip_gen: v7x
topology: tpu7x:2x2x1
jax: 0.10.0
libtpu: 0.0.40
codegen_flags: <defaults>
</compile_context>

<pallas_src>
import functools

import jax
import jax.numpy as jnp
from jax import lax
from jax.experimental import pallas as pl
from jax.experimental.pallas import tpu as pltpu

_EPS = 1e-5
_VMEM_LIMIT = 32 * 1024 * 1024   # scoped VMEM limit; safe on v5e/v6e and v7x (64 MiB phys)
_STEP_BUDGET = 8 * 1024 * 1024   # per-grid-step working-set budget used to size B_blk


# ----------------------------- kernels ------------------------------------- #

def _conv3x3_stats_kernel(x_ref, w1_ref, t_ref, s1_ref, pad_ref):
    """t = Conv3x3(ReLU(x)) as one im2col matmul; emit partial BN1 stats."""
    B, H, W, Cin = x_ref.shape
    mm_dtype = w1_ref.dtype

    # Re-zero the 1-pixel border every step (parallel/megacore-safe; the
    # interior is fully overwritten below so the zero-padding invariant holds
    # regardless of which core / step order executes this block).
    zc = jnp.zeros((B, H + 2, 1, Cin), jnp.float32)
    zr = jnp.zeros((B, 1, W + 2, Cin), jnp.float32)
    pad_ref[:, :, 0:1, :] = zc
    pad_ref[:, :, W + 1:W + 2, :] = zc
    pad_ref[:, 0:1, :, :] = zr
    pad_ref[:, H + 1:H + 2, :, :] = zr

    # ReLU fused into the interior write (ReLU(0) == 0 on the border, so this
    # equals zero-padding ReLU(x)).
    pad_ref[:, 1:H + 1, 1:W + 1, :] = jnp.maximum(
        x_ref[...].astype(jnp.float32), 0.0)

    h = pad_ref[...]                                    # (B, H+2, W+2, Cin)
    # im2col patch (B*H*W, 9*Cin); (dy, dx, cin) ordering matches w1.reshape.
    cols = []
    for dy in range(3):
        for dx in range(3):
            cols.append(h[:, dy:dy + H, dx:dx + W, :].reshape(B * H * W, Cin))
    patch = jnp.concatenate(cols, axis=-1).astype(mm_dtype)   # (B*HW, 9*Cin)

    # bf16 (or f32 on the verification path) MXU operands, f32 accumulation.
    t = jnp.dot(patch, w1_ref[...], preferred_element_type=jnp.float32)
    t_ref[...] = t.astype(t_ref.dtype)                  # (B*HW, Crh)

    # Partial BN1 statistics for this block (reduced in the wrapper).
    s1_ref[0] = jnp.concatenate(
        [jnp.sum(t, axis=0, keepdims=True),
         jnp.sum(t * t, axis=0, keepdims=True)], axis=0)


def _bn1_conv1x1_stats_kernel(t_ref, a1_ref, c1_ref, w2_ref, y2_ref, s2_ref):
    """y2 = Conv1x1(ReLU(BN1(t))); emit partial BN2 stats."""
    mm_dtype = w2_ref.dtype
    t = t_ref[...].astype(jnp.float32)                  # (R, Crh)
    y1 = jnp.maximum(t * a1_ref[...] + c1_ref[...], 0.0)
    y2 = jnp.dot(y1.astype(mm_dtype), w2_ref[...],
                 preferred_element_type=jnp.float32)    # (R, Cout) f32
    y2_ref[...] = y2.astype(y2_ref.dtype)
    s2_ref[0] = jnp.concatenate(
        [jnp.sum(y2, axis=0, keepdims=True),
         jnp.sum(y2 * y2, axis=0, keepdims=True)], axis=0)


def _bn2_residual_kernel(x_ref, y2_ref, a2_ref, c2_ref, o_ref, *, final_relu):
    """out = x + BN2(y2), optionally followed by the stack's final ReLU."""
    y = y2_ref[...].astype(jnp.float32) * a2_ref[...] + c2_ref[...]
    out = x_ref[...].astype(jnp.float32) + y
    if final_relu:
        out = jnp.maximum(out, 0.0)
    o_ref[...] = out.astype(o_ref.dtype)


# ----------------------------- wrappers ------------------------------------ #

def _full_spec(shape):
    """Whole-array block resident across the grid."""
    nd = len(shape)
    return pl.BlockSpec(shape, lambda n, _nd=nd: (0,) * _nd)


def _pick_batch_block(N, H, W, Cin, Crh, Cout, act_bytes):
    """Largest divisor of N whose per-step VMEM working set fits the budget.

    Divisor (not ceil-div) so every block is full: partial BN stats stay exact
    without row masking.
    """
    HW = H * W
    per_img = (
        2 * HW * Cin * 4                        # x block, double-buffered, f32
        + (H + 2) * (W + 2) * Cin * 4           # padded scratch, f32
        + HW * 9 * Cin * (4 + act_bytes)        # im2col patch (f32 build + cast)
        + 2 * HW * Crh * act_bytes              # t block, double-buffered
        + 2 * HW * Cout * act_bytes             # y2 block (passes 2/3)
    )
    cap = int(max(1, min(8, _STEP_BUDGET // max(per_img, 1), N)))
    b = 1
    for d in range(1, cap + 1):
        if N % d == 0:
            b = d
    return b


def _bn_scale_shift(s_partial, gamma, beta, M):
    """Reduce per-block (sum, sum^2) partials -> per-channel scale/shift (f32)."""
    s = jnp.sum(s_partial.astype(jnp.float32), axis=0)     # (2, C)
    mean = s[0] / M
    var = jnp.maximum(s[1] / M - mean * mean, 0.0)
    scale = gamma[0] * lax.rsqrt(var + _EPS)
    shift = beta[0] - mean * scale
    return scale.reshape(1, -1), shift.reshape(1, -1)


def _residual_layer(x, params, final_relu, act_dtype):
    """One Residual block in NHWC. x: (N, H, W, C)."""
    N, H, W, Cin = x.shape
    w1, g1, b1, w2, g2, b2 = params
    Crh = w1.shape[-1]
    Cout = w2.shape[-1]
    assert Cin == Cout, "residual add requires in_channels == num_hiddens"
    HW = H * W
    M = N * HW
    act_bytes = jnp.dtype(act_dtype).itemsize

    B = _pick_batch_block(N, H, W, Cin, Crh, Cout, act_bytes)
    G = N // B
    R = B * HW

    # im2col weight, (dy, dx, cin) -> rows; cast once for the MXU.
    w1r = w1.reshape(9 * Cin, Crh).astype(act_dtype)
    w2c = w2.astype(act_dtype)

    cp = pltpu.CompilerParams(dimension_semantics=("parallel",),
                              vmem_limit_bytes=_VMEM_LIMIT)

    # Pass 1: ReLU + 3x3 conv (single K=9*Cin matmul) + partial BN1 stats.
    t, s1p = pl.pallas_call(
        _conv3x3_stats_kernel,
        grid=(G,),
        in_specs=[pl.BlockSpec((B, H, W, Cin), lambda n: (n, 0, 0, 0)),
                  _full_spec((9 * Cin, Crh))],
        out_specs=[pl.BlockSpec((R, Crh), lambda n: (n, 0)),
                   pl.BlockSpec((1, 2, Crh), lambda n: (n, 0, 0))],
        out_shape=[jax.ShapeDtypeStruct((M, Crh), act_dtype),
                   jax.ShapeDtypeStruct((G, 2, Crh), jnp.float32)],
        scratch_shapes=[pltpu.VMEM((B, H + 2, W + 2, Cin), jnp.float32)],
        compiler_params=cp,
    )(x, w1r)

    a1, c1 = _bn_scale_shift(s1p, g1, b1, M)   # tiny (C,)-sized XLA ops

    # Pass 2: apply BN1 + ReLU + 1x1 conv + partial BN2 stats.
    y2, s2p = pl.pallas_call(
        _bn1_conv1x1_stats_kernel,
        grid=(G,),
        in_specs=[pl.BlockSpec((R, Crh), lambda n: (n, 0)),
                  _full_spec((1, Crh)),
                  _full_spec((1, Crh)),
                  _full_spec((Crh, Cout))],
        out_specs=[pl.BlockSpec((R, Cout), lambda n: (n, 0)),
                   pl.BlockSpec((1, 2, Cout), lambda n: (n, 0, 0))],
        out_shape=[jax.ShapeDtypeStruct((M, Cout), act_dtype),
                   jax.ShapeDtypeStruct((G, 2, Cout), jnp.float32)],
        compiler_params=cp,
    )(t, a1, c1, w2c)

    a2, c2 = _bn_scale_shift(s2p, g2, b2, M)

    # Pass 3: apply BN2 + residual add (+ fused final ReLU), flat (M, C) layout.
    x_flat = x.reshape(M, Cin)                 # contiguous reshape, no HBM move
    out = pl.pallas_call(
        functools.partial(_bn2_residual_kernel, final_relu=final_relu),
        grid=(G,),
        in_specs=[pl.BlockSpec((R, Cin), lambda n: (n, 0)),
                  pl.BlockSpec((R, Cout), lambda n: (n, 0)),
                  _full_spec((1, Cout)),
                  _full_spec((1, Cout))],
        out_specs=pl.BlockSpec((R, Cout), lambda n: (n, 0)),
        out_shape=jax.ShapeDtypeStruct((M, Cout), x.dtype),
        compiler_params=cp,
    )(x_flat, y2, a2, c2)
    return out.reshape(N, H, W, Cout)


def residual_stack_forward(x_nchw, layer_params, act_dtype=jnp.bfloat16):
    """x_nchw: (N, C, H, W) like PyTorch. Returns (N, C, H, W)."""
    x = jnp.transpose(x_nchw, (0, 2, 3, 1))   # -> NHWC (channels on lanes)
    n_layers = len(layer_params)
    for i, p in enumerate(layer_params):
        x = _residual_layer(x, p, final_relu=(i == n_layers - 1),
                            act_dtype=act_dtype)
    return jnp.transpose(x, (0, 3, 1, 2))     # -> NCHW


def init_residual_stack_params(key, in_channels, num_hiddens,
                               num_residual_layers, num_residual_hiddens):
    """Deterministic synthetic parameter init matching the module's shapes."""
    params = []
    for i in range(num_residual_layers):
        k = jax.random.fold_in(key, i)
        k1, k2 = jax.random.split(k)
        fan1 = 3 * 3 * in_channels
        # Conv2d(in, rh, k=3) weight stored HWIO for the NHWC kernel.
        w1 = (jax.random.normal(k1, (3, 3, in_channels, num_residual_hiddens),
                                jnp.float32) * (2.0 / fan1) ** 0.5)
        # Conv2d(rh, hid, k=1) weight as a (rh, hid) matrix.
        w2 = (jax.random.normal(k2, (num_residual_hiddens, num_hiddens),
                                jnp.float32) * (2.0 / num_residual_hiddens) ** 0.5)
        # BatchNorm2d defaults: weight=1, bias=0.
        g1 = jnp.ones((1, num_residual_hiddens), jnp.float32)
        b1 = jnp.zeros((1, num_residual_hiddens), jnp.float32)
        g2 = jnp.ones((1, num_hiddens), jnp.float32)
        b2 = jnp.zeros((1, num_hiddens), jnp.float32)
        params.append((w1, g1, b1, w2, g2, b2))
    return params


def _reference_forward(x_nchw, layer_params):
    """Pure-JAX f32 reference of the PyTorch module (train-mode BN)."""
    x = jnp.transpose(x_nchw, (0, 2, 3, 1))
    for (w1, g1, b1, w2, g2, b2) in layer_params:
        h = jax.nn.relu(x)
        t = lax.conv_general_dilated(h, w1, (1, 1), ((1, 1), (1, 1)),
                                     dimension_numbers=("NHWC", "HWIO", "NHWC"))
        mu1 = jnp.mean(t, axis=(0, 1, 2))
        v1 = jnp.mean((t - mu1) ** 2, axis=(0, 1, 2))
        y1 = jax.nn.relu((t - mu1) * lax.rsqrt(v1 + _EPS) * g1[0] + b1[0])
        y2 = jnp.einsum("nhwc,cd->nhwd", y1, w2)
        mu2 = jnp.mean(y2, axis=(0, 1, 2))
        v2 = jnp.mean((y2 - mu2) ** 2, axis=(0, 1, 2))
        x = x + (y2 - mu2) * lax.rsqrt(v2 + _EPS) * g2[0] + b2[0]
    x = jax.nn.relu(x)
    return jnp.transpose(x, (0, 3, 1, 2))


if __name__ == "__main__":
    # Small shapes: residual add requires in_channels == num_hiddens.
    N, H, W = 2, 8, 8
    in_channels = num_hiddens = 32
    num_residual_layers = 2
    num_residual_hiddens = 16

    key = jax.random.PRNGKey(0)
    kx, kp = jax.random.split(key)
    x = jax.random.normal(kx, (N, in_channels, H, W), jnp.float32)  # NCHW
    params = init_residual_stack_params(kp, in_channels, num_hiddens,
                                        num_residual_layers,
                                        num_residual_hiddens)

    ref = _reference_forward(x, params)

    # Fast path: bf16 MXU operands + bf16 inter-pass activations.
    fwd_bf16 = jax.jit(functools.partial(residual_stack_forward,
                                         act_dtype=jnp.bfloat16))
    out = jax.block_until_ready(fwd_bf16(x, params))
    assert out.shape == (N, num_hiddens, H, W)
    assert bool(jnp.all(out >= 0.0))  # final ReLU
    err_bf16 = float(jnp.max(jnp.abs(out - ref)))
    assert bool(jnp.allclose(out, ref, rtol=5e-2, atol=5e-2)), err_bf16

    # f32 verification path (same kernels, f32 operands/activations).
    fwd_f32 = jax.jit(functools.partial(residual_stack_forward,
                                        act_dtype=jnp.float32))
    out32 = jax.block_until_ready(fwd_f32(x, params))
    err_f32 = float(jnp.max(jnp.abs(out32 - ref)))
    assert bool(jnp.allclose(out32, ref, rtol=1e-3, atol=1e-3)), err_f32

    print("KERNEL_OK")
</pallas_src>

<mosaic_0001>
module attributes {stable_mosaic.version = 11 : i64} {
  func.func @_conv3x3_stats_kernel(%arg0: i32, %arg1: memref<2x8x8x32xf32, #tpu.memory_space<vmem>>, %arg2: memref<288x16xbf16, #tpu.memory_space<vmem>>, %arg3: memref<128x16xbf16, #tpu.memory_space<vmem>>, %arg4: memref<1x2x16xf32, #tpu.memory_space<vmem>>, %arg5: memref<2x10x10x32xf32, #tpu.memory_space<vmem>>) attributes {dimension_semantics = [#tpu.dimension_semantics<parallel>], iteration_bounds = array<i64: 1>, scalar_prefetch = 0 : i64, scratch_operands = 1 : i64, tpu.core_type = #tpu.core_type<tc>, window_params = [{transform_indices = @transform_0, window_bounds = array<i64: 2, 8, 8, 32>}, {pipeline_mode = #tpu.pipeline_mode<synchronous>, transform_indices = @transform_1, window_bounds = array<i64: 288, 16>}, {transform_indices = @transform_2, window_bounds = array<i64: 128, 16>}, {transform_indices = @transform_3, window_bounds = array<i64: 1, 2, 16>}]} {
    %cst = arith.constant 0.000000e+00 : f32
    %0 = vector.broadcast %cst : f32 to vector<2x10x1x32xf32>
    %cst_0 = arith.constant 0.000000e+00 : f32
    %1 = vector.broadcast %cst_0 : f32 to vector<2x1x10x32xf32>
    %c0 = arith.constant 0 : index
    %c0_1 = arith.constant 0 : index
    %c0_2 = arith.constant 0 : index
    %c0_3 = arith.constant 0 : index
    %2 = vector.load %arg5[%c0, %c0_1, %c0_2, %c0_3] : memref<2x10x10x32xf32, #tpu.memory_space<vmem>>, vector<2x10x1x32xf32>
    tpu.vector_store %arg5[%c0, %c0_1, %c0_2, %c0_3], %0 {strides = array<i32>} : memref<2x10x10x32xf32, #tpu.memory_space<vmem>>, vector<2x10x1x32xf32>,
    %c0_4 = arith.constant 0 : index
    %c0_5 = arith.constant 0 : index
    %c9 = arith.constant 9 : index
    %c0_6 = arith.constant 0 : index
    %3 = vector.load %arg5[%c0_4, %c0_5, %c9, %c0_6] : memref<2x10x10x32xf32, #tpu.memory_space<vmem>>, vector<2x10x1x32xf32>
    tpu.vector_store %arg5[%c0_4, %c0_5, %c9, %c0_6], %0 {strides = array<i32>} : memref<2x10x10x32xf32, #tpu.memory_space<vmem>>, vector<2x10x1x32xf32>,
    %c0_7 = arith.constant 0 : index
    %c0_8 = arith.constant 0 : index
    %c0_9 = arith.constant 0 : index
    %c0_10 = arith.constant 0 : index
    %4 = vector.load %arg5[%c0_7, %c0_8, %c0_9, %c0_10] : memref<2x10x10x32xf32, #tpu.memory_space<vmem>>, vector<2x1x10x32xf32>
    tpu.vector_store %arg5[%c0_7, %c0_8, %c0_9, %c0_10], %1 {strides = array<i32>} : memref<2x10x10x32xf32, #tpu.memory_space<vmem>>, vector<2x1x10x32xf32>,
    %c0_11 = arith.constant 0 : index
    %c9_12 = arith.constant 9 : index
    %c0_13 = arith.constant 0 : index
    %c0_14 = arith.constant 0 : index
    %5 = vector.load %arg5[%c0_11, %c9_12, %c0_13, %c0_14] : memref<2x10x10x32xf32, #tpu.memory_space<vmem>>, vector<2x1x10x32xf32>
    tpu.vector_store %arg5[%c0_11, %c9_12, %c0_13, %c0_14], %1 {strides = array<i32>} : memref<2x10x10x32xf32, #tpu.memory_space<vmem>>, vector<2x1x10x32xf32>,
    %c0_15 = arith.constant 0 : index
    %c0_16 = arith.constant 0 : index
    %c0_17 = arith.constant 0 : index
    %c0_18 = arith.constant 0 : index
    %6 = vector.load %arg1[%c0_15, %c0_16, %c0_17, %c0_18] : memref<2x8x8x32xf32, #tpu.memory_space<vmem>>, vector<2x8x8x32xf32>
    %cst_19 = arith.constant 0.000000e+00 : f32
    %7 = vector.broadcast %cst_19 : f32 to vector<2x8x8x32xf32>
    %8 = arith.maximumf %6, %7 : vector<2x8x8x32xf32>
    %c0_20 = arith.constant 0 : index
    %c1 = arith.constant 1 : index
    %c1_21 = arith.constant 1 : index
    %c0_22 = arith.constant 0 : index
    %9 = vector.load %arg5[%c0_20, %c1, %c1_21, %c0_22] : memref<2x10x10x32xf32, #tpu.memory_space<vmem>>, vector<2x8x8x32xf32>
    tpu.vector_store %arg5[%c0_20, %c1, %c1_21, %c0_22], %8 {strides = array<i32>} : memref<2x10x10x32xf32, #tpu.memory_space<vmem>>, vector<2x8x8x32xf32>,
    %c0_23 = arith.constant 0 : index
    %c0_24 = arith.constant 0 : index
    %c0_25 = arith.constant 0 : index
    %c0_26 = arith.constant 0 : index
    %10 = vector.load %arg5[%c0_23, %c0_24, %c0_25, %c0_26] : memref<2x10x10x32xf32, #tpu.memory_space<vmem>>, vector<2x10x10x32xf32>
    %11 = vector.extract_strided_slice %10 {offsets = [0, 0, 0, 0], sizes = [2, 8, 8, 32], strides = [1, 1, 1, 1]} : vector<2x10x10x32xf32> to vector<2x8x8x32xf32>
    %12 = vector.shape_cast %11 : vector<2x8x8x32xf32> to vector<128x32xf32>
    %13 = vector.extract_strided_slice %10 {offsets = [0, 0, 1, 0], sizes = [2, 8, 8, 32], strides = [1, 1, 1, 1]} : vector<2x10x10x32xf32> to vector<2x8x8x32xf32>
    %14 = vector.shape_cast %13 : vector<2x8x8x32xf32> to vector<128x32xf32>
    %15 = vector.extract_strided_slice %10 {offsets = [0, 0, 2, 0], sizes = [2, 8, 8, 32], strides = [1, 1, 1, 1]} : vector<2x10x10x32xf32> to vector<2x8x8x32xf32>
    %16 = vector.shape_cast %15 : vector<2x8x8x32xf32> to vector<128x32xf32>
    %17 = vector.extract_strided_slice %10 {offsets = [0, 1, 0, 0], sizes = [2, 8, 8, 32], strides = [1, 1, 1, 1]} : vector<2x10x10x32xf32> to vector<2x8x8x32xf32>
    %18 = vector.shape_cast %17 : vector<2x8x8x32xf32> to vector<128x32xf32>
    %19 = vector.extract_strided_slice %10 {offsets = [0, 1, 1, 0], sizes = [2, 8, 8, 32], strides = [1, 1, 1, 1]} : vector<2x10x10x32xf32> to vector<2x8x8x32xf32>
    %20 = vector.shape_cast %19 : vector<2x8x8x32xf32> to vector<128x32xf32>
    %21 = vector.extract_strided_slice %10 {offsets = [0, 1, 2, 0], sizes = [2, 8, 8, 32], strides = [1, 1, 1, 1]} : vector<2x10x10x32xf32> to vector<2x8x8x32xf32>
    %22 = vector.shape_cast %21 : vector<2x8x8x32xf32> to vector<128x32xf32>
    %23 = vector.extract_strided_slice %10 {offsets = [0, 2, 0, 0], sizes = [2, 8, 8, 32], strides = [1, 1, 1, 1]} : vector<2x10x10x32xf32> to vector<2x8x8x32xf32>
    %24 = vector.shape_cast %23 : vector<2x8x8x32xf32> to vector<128x32xf32>
    %25 = vector.extract_strided_slice %10 {offsets = [0, 2, 1, 0], sizes = [2, 8, 8, 32], strides = [1, 1, 1, 1]} : vector<2x10x10x32xf32> to vector<2x8x8x32xf32>
    %26 = vector.shape_cast %25 : vector<2x8x8x32xf32> to vector<128x32xf32>
    %27 = vector.extract_strided_slice %10 {offsets = [0, 2, 2, 0], sizes = [2, 8, 8, 32], strides = [1, 1, 1, 1]} : vector<2x10x10x32xf32> to vector<2x8x8x32xf32>
    %28 = vector.shape_cast %27 : vector<2x8x8x32xf32> to vector<128x32xf32>
    %29 = tpu.concatenate %12, %14, %16, %18, %20, %22, %24, %26, %28 in 1 : vector<128x32xf32>, vector<128x32xf32>, vector<128x32xf32>, vector<128x32xf32>, vector<128x32xf32>, vector<128x32xf32>, vector<128x32xf32>, vector<128x32xf32>, vector<128x32xf32> -> vector<128x288xf32>
    %30 = arith.truncf %29 : vector<128x288xf32> to vector<128x288xbf16>
    %c0_27 = arith.constant 0 : index
    %c0_28 = arith.constant 0 : index
    %31 = vector.load %arg2[%c0_27, %c0_28] : memref<288x16xbf16, #tpu.memory_space<vmem>>, vector<288x16xbf16>
    %cst_29 = arith.constant dense<0.000000e+00> : vector<128x16xf32>
    %32 = tpu.matmul %30, %31, %cst_29 {dimension_numbers = #tpu.dot_dimension_numbers<[1], [0], [0], [1], [0, 0, 1, 1], [], []>} : vector<128x288xbf16>, vector<288x16xbf16>, vector<128x16xf32> -> vector<128x16xf32>
    %33 = arith.truncf %32 : vector<128x16xf32> to vector<128x16xbf16>
    %c0_30 = arith.constant 0 : index
    %c0_31 = arith.constant 0 : index
    %34 = vector.load %arg3[%c0_30, %c0_31] : memref<128x16xbf16, #tpu.memory_space<vmem>>, vector<128x16xbf16>
    tpu.vector_store %arg3[%c0_30, %c0_31], %33 {strides = array<i32>} : memref<128x16xbf16, #tpu.memory_space<vmem>>, vector<128x16xbf16>,
    %cst_32 = arith.constant dense<0.000000e+00> : vector<16xf32>
    %35 = vector.multi_reduction <add>, %32, %cst_32 [0] : vector<128x16xf32> to vector<16xf32>
    %36 = vector.shape_cast %35 : vector<16xf32> to vector<1x16xf32>
    %37 = arith.mulf %32, %32 : vector<128x16xf32>
    %cst_33 = arith.constant dense<0.000000e+00> : vector<16xf32>
    %38 = vector.multi_reduction <add>, %37, %cst_33 [0] : vector<128x16xf32> to vector<16xf32>
    %39 = vector.shape_cast %38 : vector<16xf32> to vector<1x16xf32>
    %40 = tpu.concatenate %36, %39 in 0 : vector<1x16xf32>, vector<1x16xf32> -> vector<2x16xf32>
    %c0_34 = arith.constant 0 : index
    %c0_35 = arith.constant 0 : index
    %c0_36 = arith.constant 0 : index
    %41 = vector.load %arg4[%c0_34, %c0_35, %c0_36] : memref<1x2x16xf32, #tpu.memory_space<vmem>>, vector<1x2x16xf32>
    %42 = vector.shape_cast %41 : vector<1x2x16xf32> to vector<2x16xf32>
    %43 = vector.shape_cast %40 : vector<2x16xf32> to vector<1x2x16xf32>
    tpu.vector_store %arg4[%c0_34, %c0_35, %c0_36], %43 {strides = array<i32>} : memref<1x2x16xf32, #tpu.memory_space<vmem>>, vector<1x2x16xf32>,
    return
  }
  func.func @transform_0(%arg0: i32) -> (i32, i32, i32, i32) {
    %c0_i32 = arith.constant 0 : i32
    %c0_i32_0 = arith.constant 0 : i32
    %c0_i32_1 = arith.constant 0 : i32
    %c0_i32_2 = arith.constant 0 : i32
    return %arg0, %c0_i32, %c0_i32_0, %c0_i32_1 : i32, i32, i32, i32
  }
  func.func @transform_1(%arg0: i32) -> (i32, i32) {
    %c0_i32 = arith.constant 0 : i32
    %c0_i32_0 = arith.constant 0 : i32
    %c0_i32_1 = arith.constant 0 : i32
    return %c0_i32, %c0_i32_0 : i32, i32
  }
  func.func @transform_2(%arg0: i32) -> (i32, i32) {
    %c0_i32 = arith.constant 0 : i32
    %c0_i32_0 = arith.constant 0 : i32
    return %arg0, %c0_i32 : i32, i32
  }
  func.func @transform_3(%arg0: i32) -> (i32, i32, i32) {
    %c0_i32 = arith.constant 0 : i32
    %c0_i32_0 = arith.constant 0 : i32
    %c0_i32_1 = arith.constant 0 : i32
    return %arg0, %c0_i32, %c0_i32_0 : i32, i32, i32
  }
}

module attributes {stable_mosaic.version = 11 : i64} {
  func.func @_bn1_conv1x1_stats_kernel(%arg0: i32, %arg1: memref<128x16xbf16, #tpu.memory_space<vmem>>, %arg2: memref<1x16xf32, #tpu.memory_space<vmem>>, %arg3: memref<1x16xf32, #tpu.memory_space<vmem>>, %arg4: memref<16x32xbf16, #tpu.memory_space<vmem>>, %arg5: memref<128x32xbf16, #tpu.memory_space<vmem>>, %arg6: memref<1x2x32xf32, #tpu.memory_space<vmem>>) attributes {dimension_semantics = [#tpu.dimension_semantics<parallel>], iteration_bounds = array<i64: 1>, scalar_prefetch = 0 : i64, scratch_operands = 0 : i64, tpu.core_type = #tpu.core_type<tc>, window_params = [{transform_indices = @transform_0, window_bounds = array<i64: 128, 16>}, {pipeline_mode = #tpu.pipeline_mode<synchronous>, transform_indices = @transform_1, window_bounds = array<i64: 1, 16>}, {pipeline_mode = #tpu.pipeline_mode<synchronous>, transform_indices = @transform_2, window_bounds = array<i64: 1, 16>}, {pipeline_mode = #tpu.pipeline_mode<synchronous>, transform_indices = @transform_3, window_bounds = array<i64: 16, 32>}, {transform_indices = @transform_4, window_bounds = array<i64: 128, 32>}, {transform_indices = @transform_5, window_bounds = array<i64: 1, 2, 32>}]} {
    %c0 = arith.constant 0 : index
    %c0_0 = arith.constant 0 : index
    %0 = vector.load %arg1[%c0, %c0_0] : memref<128x16xbf16, #tpu.memory_space<vmem>>, vector<128x16xbf16>
    %1 = arith.extf %0 : vector<128x16xbf16> to vector<128x16xf32>
    %c0_1 = arith.constant 0 : index
    %c0_2 = arith.constant 0 : index
    %2 = vector.load %arg2[%c0_1, %c0_2] : memref<1x16xf32, #tpu.memory_space<vmem>>, vector<1x16xf32>
    %3 = vector.broadcast %2 : vector<1x16xf32> to vector<128x16xf32>
    %4 = arith.mulf %1, %3 : vector<128x16xf32>
    %c0_3 = arith.constant 0 : index
    %c0_4 = arith.constant 0 : index
    %5 = vector.load %arg3[%c0_3, %c0_4] : memref<1x16xf32, #tpu.memory_space<vmem>>, vector<1x16xf32>
    %6 = vector.broadcast %5 : vector<1x16xf32> to vector<128x16xf32>
    %7 = arith.addf %4, %6 : vector<128x16xf32>
    %cst = arith.constant 0.000000e+00 : f32
    %8 = vector.broadcast %cst : f32 to vector<128x16xf32>
    %9 = arith.maximumf %7, %8 : vector<128x16xf32>
    %10 = arith.truncf %9 : vector<128x16xf32> to vector<128x16xbf16>
    %c0_5 = arith.constant 0 : index
    %c0_6 = arith.constant 0 : index
    %11 = vector.load %arg4[%c0_5, %c0_6] : memref<16x32xbf16, #tpu.memory_space<vmem>>, vector<16x32xbf16>
    %cst_7 = arith.constant dense<0.000000e+00> : vector<128x32xf32>
    %12 = tpu.matmul %10, %11, %cst_7 {dimension_numbers = #tpu.dot_dimension_numbers<[1], [0], [0], [1], [0, 0, 1, 1], [], []>} : vector<128x16xbf16>, vector<16x32xbf16>, vector<128x32xf32> -> vector<128x32xf32>
    %13 = arith.truncf %12 : vector<128x32xf32> to vector<128x32xbf16>
    %c0_8 = arith.constant 0 : index
    %c0_9 = arith.constant 0 : index
    %14 = vector.load %arg5[%c0_8, %c0_9] : memref<128x32xbf16, #tpu.memory_space<vmem>>, vector<128x32xbf16>
    tpu.vector_store %arg5[%c0_8, %c0_9], %13 {strides = array<i32>} : memref<128x32xbf16, #tpu.memory_space<vmem>>, vector<128x32xbf16>,
    %cst_10 = arith.constant dense<0.000000e+00> : vector<32xf32>
    %15 = vector.multi_reduction <add>, %12, %cst_10 [0] : vector<128x32xf32> to vector<32xf32>
    %16 = vector.shape_cast %15 : vector<32xf32> to vector<1x32xf32>
    %17 = arith.mulf %12, %12 : vector<128x32xf32>
    %cst_11 = arith.constant dense<0.000000e+00> : vector<32xf32>
    %18 = vector.multi_reduction <add>, %17, %cst_11 [0] : vector<128x32xf32> to vector<32xf32>
    %19 = vector.shape_cast %18 : vector<32xf32> to vector<1x32xf32>
    %20 = tpu.concatenate %16, %19 in 0 : vector<1x32xf32>, vector<1x32xf32> -> vector<2x32xf32>
    %c0_12 = arith.constant 0 : index
    %c0_13 = arith.constant 0 : index
    %c0_14 = arith.constant 0 : index
    %21 = vector.load %arg6[%c0_12, %c0_13, %c0_14] : memref<1x2x32xf32, #tpu.memory_space<vmem>>, vector<1x2x32xf32>
    %22 = vector.shape_cast %21 : vector<1x2x32xf32> to vector<2x32xf32>
    %23 = vector.shape_cast %20 : vector<2x32xf32> to vector<1x2x32xf32>
    tpu.vector_store %arg6[%c0_12, %c0_13, %c0_14], %23 {strides = array<i32>} : memref<1x2x32xf32, #tpu.memory_space<vmem>>, vector<1x2x32xf32>,
    return
  }
  func.func @transform_0(%arg0: i32) -> (i32, i32) {
    %c0_i32 = arith.constant 0 : i32
    %c0_i32_0 = arith.constant 0 : i32
    return %arg0, %c0_i32 : i32, i32
  }
  func.func @transform_1(%arg0: i32) -> (i32, i32) {
    %c0_i32 = arith.constant 0 : i32
    %c0_i32_0 = arith.constant 0 : i32
    %c0_i32_1 = arith.constant 0 : i32
    return %c0_i32, %c0_i32_0 : i32, i32
  }
  func.func @transform_2(%arg0: i32) -> (i32, i32) {
    %c0_i32 = arith.constant 0 : i32
    %c0_i32_0 = arith.constant 0 : i32
    %c0_i32_1 = arith.constant 0 : i32
    return %c0_i32, %c0_i32_0 : i32, i32
  }
  func.func @transform_3(%arg0: i32) -> (i32, i32) {
    %c0_i32 = arith.constant 0 : i32
    %c0_i32_0 = arith.constant 0 : i32
    %c0_i32_1 = arith.constant 0 : i32
    return %c0_i32, %c0_i32_0 : i32, i32
  }
  func.func @transform_4(%arg0: i32) -> (i32, i32) {
    %c0_i32 = arith.constant 0 : i32
    %c0_i32_0 = arith.constant 0 : i32
    return %arg0, %c0_i32 : i32, i32
  }
  func.func @transform_5(%arg0: i32) -> (i32, i32, i32) {
    %c0_i32 = arith.constant 0 : i32
    %c0_i32_0 = arith.constant 0 : i32
    %c0_i32_1 = arith.constant 0 : i32
    return %arg0, %c0_i32, %c0_i32_0 : i32, i32, i32
  }
}

module attributes {stable_mosaic.version = 11 : i64} {
  func.func @_bn2_residual_kernel(%arg0: i32, %arg1: memref<128x32xf32, #tpu.memory_space<vmem>>, %arg2: memref<128x32xbf16, #tpu.memory_space<vmem>>, %arg3: memref<1x32xf32, #tpu.memory_space<vmem>>, %arg4: memref<1x32xf32, #tpu.memory_space<vmem>>, %arg5: memref<128x32xf32, #tpu.memory_space<vmem>>) attributes {dimension_semantics = [#tpu.dimension_semantics<parallel>], iteration_bounds = array<i64: 1>, scalar_prefetch = 0 : i64, scratch_operands = 0 : i64, tpu.core_type = #tpu.core_type<tc>, window_params = [{transform_indices = @transform_0, window_bounds = array<i64: 128, 32>}, {transform_indices = @transform_1, window_bounds = array<i64: 128, 32>}, {pipeline_mode = #tpu.pipeline_mode<synchronous>, transform_indices = @transform_2, window_bounds = array<i64: 1, 32>}, {pipeline_mode = #tpu.pipeline_mode<synchronous>, transform_indices = @transform_3, window_bounds = array<i64: 1, 32>}, {transform_indices = @transform_4, window_bounds = array<i64: 128, 32>}]} {
    %c0 = arith.constant 0 : index
    %c0_0 = arith.constant 0 : index
    %0 = vector.load %arg2[%c0, %c0_0] : memref<128x32xbf16, #tpu.memory_space<vmem>>, vector<128x32xbf16>
    %1 = arith.extf %0 : vector<128x32xbf16> to vector<128x32xf32>
    %c0_1 = arith.constant 0 : index
    %c0_2 = arith.constant 0 : index
    %2 = vector.load %arg3[%c0_1, %c0_2] : memref<1x32xf32, #tpu.memory_space<vmem>>, vector<1x32xf32>
    %3 = vector.broadcast %2 : vector<1x32xf32> to vector<128x32xf32>
    %4 = arith.mulf %1, %3 : vector<128x32xf32>
    %c0_3 = arith.constant 0 : index
    %c0_4 = arith.constant 0 : index
    %5 = vector.load %arg4[%c0_3, %c0_4] : memref<1x32xf32, #tpu.memory_space<vmem>>, vector<1x32xf32>
    %6 = vector.broadcast %5 : vector<1x32xf32> to vector<128x32xf32>
    %7 = arith.addf %4, %6 : vector<128x32xf32>
    %c0_5 = arith.constant 0 : index
    %c0_6 = arith.constant 0 : index
    %8 = vector.load %arg1[%c0_5, %c0_6] : memref<128x32xf32, #tpu.memory_space<vmem>>, vector<128x32xf32>
    %9 = arith.addf %8, %7 : vector<128x32xf32>
    %c0_7 = arith.constant 0 : index
    %c0_8 = arith.constant 0 : index
    %10 = vector.load %arg5[%c0_7, %c0_8] : memref<128x32xf32, #tpu.memory_space<vmem>>, vector<128x32xf32>
    tpu.vector_store %arg5[%c0_7, %c0_8], %9 {strides = array<i32>} : memref<128x32xf32, #tpu.memory_space<vmem>>, vector<128x32xf32>,
    return
  }
  func.func @transform_0(%arg0: i32) -> (i32, i32) {
    %c0_i32 = arith.constant 0 : i32
    %c0_i32_0 = arith.constant 0 : i32
    return %arg0, %c0_i32 : i32, i32
  }
  func.func @transform_1(%arg0: i32) -> (i32, i32) {
    %c0_i32 = arith.constant 0 : i32
    %c0_i32_0 = arith.constant 0 : i32
    return %arg0, %c0_i32 : i32, i32
  }
  func.func @transform_2(%arg0: i32) -> (i32, i32) {
    %c0_i32 = arith.constant 0 : i32
    %c0_i32_0 = arith.constant 0 : i32
    %c0_i32_1 = arith.constant 0 : i32
    return %c0_i32, %c0_i32_0 : i32, i32
  }
  func.func @transform_3(%arg0: i32) -> (i32, i32) {
    %c0_i32 = arith.constant 0 : i32
    %c0_i32_0 = arith.constant 0 : i32
    %c0_i32_1 = arith.constant 0 : i32
    return %c0_i32, %c0_i32_0 : i32, i32
  }
  func.func @transform_4(%arg0: i32) -> (i32, i32) {
    %c0_i32 = arith.constant 0 : i32
    %c0_i32_0 = arith.constant 0 : i32
    return %arg0, %c0_i32 : i32, i32
  }
}

module attributes {stable_mosaic.version = 11 : i64} {
  func.func @_bn2_residual_kernel(%arg0: i32, %arg1: memref<128x32xf32, #tpu.memory_space<vmem>>, %arg2: memref<128x32xbf16, #tpu.memory_space<vmem>>, %arg3: memref<1x32xf32, #tpu.memory_space<vmem>>, %arg4: memref<1x32xf32, #tpu.memory_space<vmem>>, %arg5: memref<128x32xf32, #tpu.memory_space<vmem>>) attributes {dimension_semantics = [#tpu.dimension_semantics<parallel>], iteration_bounds = array<i64: 1>, scalar_prefetch = 0 : i64, scratch_operands = 0 : i64, tpu.core_type = #tpu.core_type<tc>, window_params = [{transform_indices = @transform_0, window_bounds = array<i64: 128, 32>}, {transform_indices = @transform_1, window_bounds = array<i64: 128, 32>}, {pipeline_mode = #tpu.pipeline_mode<synchronous>, transform_indices = @transform_2, window_bounds = array<i64: 1, 32>}, {pipeline_mode = #tpu.pipeline_mode<synchronous>, transform_indices = @transform_3, window_bounds = array<i64: 1, 32>}, {transform_indices = @transform_4, window_bounds = array<i64: 128, 32>}]} {
    %c0 = arith.constant 0 : index
    %c0_0 = arith.constant 0 : index
    %0 = vector.load %arg2[%c0, %c0_0] : memref<128x32xbf16, #tpu.memory_space<vmem>>, vector<128x32xbf16>
    %1 = arith.extf %0 : vector<128x32xbf16> to vector<128x32xf32>
    %c0_1 = arith.constant 0 : index
    %c0_2 = arith.constant 0 : index
    %2 = vector.load %arg3[%c0_1, %c0_2] : memref<1x32xf32, #tpu.memory_space<vmem>>, vector<1x32xf32>
    %3 = vector.broadcast %2 : vector<1x32xf32> to vector<128x32xf32>
    %4 = arith.mulf %1, %3 : vector<128x32xf32>
    %c0_3 = arith.constant 0 : index
    %c0_4 = arith.constant 0 : index
    %5 = vector.load %arg4[%c0_3, %c0_4] : memref<1x32xf32, #tpu.memory_space<vmem>>, vector<1x32xf32>
    %6 = vector.broadcast %5 : vector<1x32xf32> to vector<128x32xf32>
    %7 = arith.addf %4, %6 : vector<128x32xf32>
    %c0_5 = arith.constant 0 : index
    %c0_6 = arith.constant 0 : index
    %8 = vector.load %arg1[%c0_5, %c0_6] : memref<128x32xf32, #tpu.memory_space<vmem>>, vector<128x32xf32>
    %9 = arith.addf %8, %7 : vector<128x32xf32>
    %cst = arith.constant 0.000000e+00 : f32
    %10 = vector.broadcast %cst : f32 to vector<128x32xf32>
    %11 = arith.maximumf %9, %10 : vector<128x32xf32>
    %c0_7 = arith.constant 0 : index
    %c0_8 = arith.constant 0 : index
    %12 = vector.load %arg5[%c0_7, %c0_8] : memref<128x32xf32, #tpu.memory_space<vmem>>, vector<128x32xf32>
    tpu.vector_store %arg5[%c0_7, %c0_8], %11 {strides = array<i32>} : memref<128x32xf32, #tpu.memory_space<vmem>>, vector<128x32xf32>,
    return
  }
  func.func @transform_0(%arg0: i32) -> (i32, i32) {
    %c0_i32 = arith.constant 0 : i32
    %c0_i32_0 = arith.constant 0 : i32
    return %arg0, %c0_i32 : i32, i32
  }
  func.func @transform_1(%arg0: i32) -> (i32, i32) {
    %c0_i32 = arith.constant 0 : i32
    %c0_i32_0 = arith.constant 0 : i32
    return %arg0, %c0_i32 : i32, i32
  }
  func.func @transform_2(%arg0: i32) -> (i32, i32) {
    %c0_i32 = arith.constant 0 : i32
    %c0_i32_0 = arith.constant 0 : i32
    %c0_i32_1 = arith.constant 0 : i32
    return %c0_i32, %c0_i32_0 : i32, i32
  }
  func.func @transform_3(%arg0: i32) -> (i32, i32) {
    %c0_i32 = arith.constant 0 : i32
    %c0_i32_0 = arith.constant 0 : i32
    %c0_i32_1 = arith.constant 0 : i32
    return %c0_i32, %c0_i32_0 : i32, i32
  }
  func.func @transform_4(%arg0: i32) -> (i32, i32) {
    %c0_i32 = arith.constant 0 : i32
    %c0_i32_0 = arith.constant 0 : i32
    return %arg0, %c0_i32 : i32, i32
  }
}

</mosaic_0001>

<llo_original>
// kernel: residual_stack_forward.8
$region0: #{residual_stack_forward.8}
  #allocation0 [shape = 'u32[]', space=smem, size = 0x4, offset = 0x4, fixed_abs, tag = 'smem constant byte address 0x4 - core index']
  #allocation1 [shape = 'u32[144,128]{1,0:T(1,128)}', space=vmem, size = 0x12000, scoped, tag = 'internal scratch']
  %s0 = inlined_call_operand.vmem [shape: f32[128,32], index: 0, kind: input, shape index: {}]
  %s1 = inlined_call_operand.vmem [shape: bf16[128,32], index: 1, kind: input, shape index: {}]
  %s2 = inlined_call_operand.vmem [shape: f32[1,32], index: 2, kind: input, shape index: {}]
  %s3 = inlined_call_operand.vmem [shape: f32[1,32], index: 3, kind: input, shape index: {}]
  %s4 = inlined_call_operand.vmem [shape: f32[128,32], index: 4, kind: output, shape index: {}]
  %s5 = sld [smem:[#allocation0]]
  $region26: #{residual_stack_forward.8} parent=0
    _
  %s7 = ssub.s32 1, %s5
  %s8 = scalar_select 0, %s7, %s5
  // Predicated region
  $region2: #{residual_stack_forward.8} parent=0 // pred_check
    _
  $region3: #{residual_stack_forward.8} parent=0 // pred_check_branch
    %10 = sbr.rel (0) target = $region5
  $region4: #{residual_stack_forward.8} parent=0 // pred_region
    _
  $region5: #{residual_stack_forward.8} parent=0 // pred_fallthru
    _
  // Predicated region
  $region6: #{residual_stack_forward.8} parent=0 // pred_check
    _
  $region7: #{residual_stack_forward.8} parent=0 // pred_check_branch
    %12 = sbr.rel (0) target = $region9
  $region8: #{residual_stack_forward.8} parent=0 // pred_region
    _
  $region9: #{residual_stack_forward.8} parent=0 // pred_fallthru
    _
  // Predicated region
  $region10: #{residual_stack_forward.8} parent=0 // pred_check
    _
  $region11: #{residual_stack_forward.8} parent=0 // pred_check_branch
    %14 = sbr.rel (0) target = $region13
  $region12: #{residual_stack_forward.8} parent=0 // pred_region
    _
  $region13: #{residual_stack_forward.8} parent=0 // pred_fallthru
    _
  // Predicated region
  $region14: #{residual_stack_forward.8} parent=0 // pred_check
    _
  $region15: #{residual_stack_forward.8} parent=0 // pred_check_branch
    %16 = sbr.rel (0) target = $region17
  $region16: #{residual_stack_forward.8} parent=0 // pred_region
    _
  $region17: #{residual_stack_forward.8} parent=0 // pred_fallthru
    _
  %v17 = vld [vmem:[%s1] sm:$0xf]
  %v18 = vld [vmem:[%s1 + $0x4] sm:$0xf]
  %v19 = vld [vmem:[%s1 + $0x8] sm:$0xf]
  %v20 = vld [vmem:[%s1 + $0xc] sm:$0xf]
  %v21 = vld [vmem:[%s1 + $0x10] sm:$0xf]
  %v22 = vld [vmem:[%s1 + $0x14] sm:$0xf]
  %v23 = vld [vmem:[%s1 + $0x18] sm:$0xf]
  %v24 = vld [vmem:[%s1 + $0x1c] sm:$0xf]
  %v25 = vld [vmem:[%s1 + $0x20] sm:$0xf]
  %v26 = vld [vmem:[%s1 + $0x24] sm:$0xf]
  %v27 = vld [vmem:[%s1 + $0x28] sm:$0xf]
  %v28 = vld [vmem:[%s1 + $0x2c] sm:$0xf]
  %v29 = vld [vmem:[%s1 + $0x30] sm:$0xf]
  %v30 = vld [vmem:[%s1 + $0x34] sm:$0xf]
  %v31 = vld [vmem:[%s1 + $0x38] sm:$0xf]
  %v32 = vld [vmem:[%s1 + $0x3c] sm:$0xf]
  %v33 = vunpack.c.l.bf16 %v17
  %v34 = vunpack.c.l.bf16 %v18
  %v35 = vunpack.c.l.bf16 %v19
  %v36 = vunpack.c.l.bf16 %v20
  %v37 = vunpack.c.l.bf16 %v21
  %v38 = vunpack.c.l.bf16 %v22
  %v39 = vunpack.c.l.bf16 %v23
  %v40 = vunpack.c.l.bf16 %v24
  %v41 = vunpack.c.l.bf16 %v25
  %v42 = vunpack.c.l.bf16 %v26
  %v43 = vunpack.c.l.bf16 %v27
  %v44 = vunpack.c.l.bf16 %v28
  %v45 = vunpack.c.l.bf16 %v29
  %v46 = vunpack.c.l.bf16 %v30
  %v47 = vunpack.c.l.bf16 %v31
  %v48 = vunpack.c.l.bf16 %v32
  %v49 = vld [vmem:[%s2] sm:$0x1]
  %v51 = vlaneseq
  %v52 = vshrl.u32 %v51, 7
  %v53 = vsub.s32 0, %v52
  %v54 = vrot.slane %v49, %v53
  %v56 = vmul.f32 %v33, %v54
  %v57 = vmul.f32 %v34, %v54
  %v58 = vmul.f32 %v35, %v54
  %v59 = vmul.f32 %v36, %v54
  %v60 = vmul.f32 %v37, %v54
  %v61 = vmul.f32 %v38, %v54
  %v62 = vmul.f32 %v39, %v54
  %v63 = vmul.f32 %v40, %v54
  %v64 = vmul.f32 %v41, %v54
  %v65 = vmul.f32 %v42, %v54
  %v66 = vmul.f32 %v43, %v54
  %v67 = vmul.f32 %v44, %v54
  %v68 = vmul.f32 %v45, %v54
  %v69 = vmul.f32 %v46, %v54
  %v70 = vmul.f32 %v47, %v54
  %v71 = vmul.f32 %v48, %v54
  %v72 = vld [vmem:[%s3] sm:$0x1]
  %v74 = vlaneseq
  %v75 = vshrl.u32 %v74, 7
  %v76 = vsub.s32 0, %v75
  %v77 = vrot.slane %v72, %v76
  %v79 = vadd.f32 %v56, %v77
  %v80 = vadd.f32 %v57, %v77
  %v81 = vadd.f32 %v58, %v77
  %v82 = vadd.f32 %v59, %v77
  %v83 = vadd.f32 %v60, %v77
  %v84 = vadd.f32 %v61, %v77
  %v85 = vadd.f32 %v62, %v77
  %v86 = vadd.f32 %v63, %v77
  %v87 = vadd.f32 %v64, %v77
  %v88 = vadd.f32 %v65, %v77
  %v89 = vadd.f32 %v66, %v77
  %v90 = vadd.f32 %v67, %v77
  %v91 = vadd.f32 %v68, %v77
  %v92 = vadd.f32 %v69, %v77
  %v93 = vadd.f32 %v70, %v77
  %v94 = vadd.f32 %v71, %v77
  %v95 = vld [vmem:[%s0] sm:$0xff]
  %v96 = vld [vmem:[%s0 + $0x8] sm:$0xff]
  %v97 = vld [vmem:[%s0 + $0x10] sm:$0xff]
  %v98 = vld [vmem:[%s0 + $0x18] sm:$0xff]
  %v99 = vld [vmem:[%s0 + $0x20] sm:$0xff]
  %v100 = vld [vmem:[%s0 + $0x28] sm:$0xff]
  %v101 = vld [vmem:[%s0 + $0x30] sm:$0xff]
  %v102 = vld [vmem:[%s0 + $0x38] sm:$0xff]
  %v103 = vld [vmem:[%s0 + $0x40] sm:$0xff]
  %v104 = vld [vmem:[%s0 + $0x48] sm:$0xff]
  %v105 = vld [vmem:[%s0 + $0x50] sm:$0xff]
  %v106 = vld [vmem:[%s0 + $0x58] sm:$0xff]
  %v107 = vld [vmem:[%s0 + $0x60] sm:$0xff]
  %v108 = vld [vmem:[%s0 + $0x68] sm:$0xff]
  %v109 = vld [vmem:[%s0 + $0x70] sm:$0xff]
  %v110 = vld [vmem:[%s0 + $0x78] sm:$0xff]
  %v111 = vadd.f32 %v95, %v79
  %v112 = vadd.f32 %v96, %v80
  %v113 = vadd.f32 %v97, %v81
  %v114 = vadd.f32 %v98, %v82
  %v115 = vadd.f32 %v99, %v83
  %v116 = vadd.f32 %v100, %v84
  %v117 = vadd.f32 %v101, %v85
  %v118 = vadd.f32 %v102, %v86
  %v119 = vadd.f32 %v103, %v87
  %v120 = vadd.f32 %v104, %v88
  %v121 = vadd.f32 %v105, %v89
  %v122 = vadd.f32 %v106, %v90
  %v123 = vadd.f32 %v107, %v91
  %v124 = vadd.f32 %v108, %v92
  %v125 = vadd.f32 %v109, %v93
  %v126 = vadd.f32 %v110, %v94
  %vm127 = vcmask 261120
  %128 = vst.msk [vmem:[%s4] sm:$0xff] %vm127, %v111
  %129 = vst.msk [vmem:[%s4 + $0x8] sm:$0xff] %vm127, %v112
  %130 = vst.msk [vmem:[%s4 + $0x10] sm:$0xff] %vm127, %v113
  %131 = vst.msk [vmem:[%s4 + $0x18] sm:$0xff] %vm127, %v114
  %132 = vst.msk [vmem:[%s4 + $0x20] sm:$0xff] %vm127, %v115
  %133 = vst.msk [vmem:[%s4 + $0x28] sm:$0xff] %vm127, %v116
  %134 = vst.msk [vmem:[%s4 + $0x30] sm:$0xff] %vm127, %v117
  %135 = vst.msk [vmem:[%s4 + $0x38] sm:$0xff] %vm127, %v118
  %136 = vst.msk [vmem:[%s4 + $0x40] sm:$0xff] %vm127, %v119
  %137 = vst.msk [vmem:[%s4 + $0x48] sm:$0xff] %vm127, %v120
  %138 = vst.msk [vmem:[%s4 + $0x50] sm:$0xff] %vm127, %v121
  %139 = vst.msk [vmem:[%s4 + $0x58] sm:$0xff] %vm127, %v122
  %140 = vst.msk [vmem:[%s4 + $0x60] sm:$0xff] %vm127, %v123
  %141 = vst.msk [vmem:[%s4 + $0x68] sm:$0xff] %vm127, %v124
  %142 = vst.msk [vmem:[%s4 + $0x70] sm:$0xff] %vm127, %v125
  %143 = vst.msk [vmem:[%s4 + $0x78] sm:$0xff] %vm127, %v126
  // Predicated region
  $region18: #{residual_stack_forward.8} parent=0 // pred_check
    _
  $region19: #{residual_stack_forward.8} parent=0 // pred_check_branch
    %145 = sbr.rel (0) target = $region21
  $region20: #{residual_stack_forward.8} parent=0 // pred_region
    _
  $region21: #{residual_stack_forward.8} parent=0 // pred_fallthru
    _
  // Predicated region
  $region22: #{residual_stack_forward.8} parent=0 // pred_check
    _
  $region23: #{residual_stack_forward.8} parent=0 // pred_check_branch
    %147 = sbr.rel (0) target = $region25
  $region24: #{residual_stack_forward.8} parent=0 // pred_region
    _
  $region25: #{residual_stack_forward.8} parent=0 // pred_fallthru
    _

// kernel: residual_stack_forward.7
$region0: #{residual_stack_forward.7}
  #allocation0 [shape = 'u32[]', space=smem, size = 0x4, offset = 0x4, fixed_abs, tag = 'smem constant byte address 0x4 - core index']
  #allocation1 [shape = 'u32[144,128]{1,0:T(1,128)}', space=vmem, size = 0x12000, scoped, tag = 'internal scratch']
  %s0 = inlined_call_operand.vmem [shape: bf16[128,16], index: 0, kind: input, shape index: {}]
  %s1 = inlined_call_operand.vmem [shape: f32[1,16], index: 1, kind: input, shape index: {}]
  %s2 = inlined_call_operand.vmem [shape: f32[1,16], index: 2, kind: input, shape index: {}]
  %s3 = inlined_call_operand.vmem [shape: bf16[16,32], index: 3, kind: input, shape index: {}]
  %s4 = inlined_call_operand.vmem [shape: bf16[128,32], index: 4, kind: output, shape index: {0}]
  %s5 = inlined_call_operand.vmem [shape: f32[1,2,32], index: 5, kind: output, shape index: {1}]
  %6 = xla_tuple %s4, %s5
  %s7 = sld [smem:[#allocation0]]
  $region34: #{residual_stack_forward.7} parent=0
    _
  %s9 = ssub.s32 1, %s7
  %s10 = scalar_select 0, %s9, %s7
  // Predicated region
  $region2: #{residual_stack_forward.7} parent=0 // pred_check
    _
  $region3: #{residual_stack_forward.7} parent=0 // pred_check_branch
    %12 = sbr.rel (0) target = $region5
  $region4: #{residual_stack_forward.7} parent=0 // pred_region
    _
  $region5: #{residual_stack_forward.7} parent=0 // pred_fallthru
    _
  // Predicated region
  $region6: #{residual_stack_forward.7} parent=0 // pred_check
    _
  $region7: #{residual_stack_forward.7} parent=0 // pred_check_branch
    %14 = sbr.rel (0) target = $region9
  $region8: #{residual_stack_forward.7} parent=0 // pred_region
    _
  $region9: #{residual_stack_forward.7} parent=0 // pred_fallthru
    _
  // Predicated region
  $region10: #{residual_stack_forward.7} parent=0 // pred_check
    _
  $region11: #{residual_stack_forward.7} parent=0 // pred_check_branch
    %16 = sbr.rel (0) target = $region13
  $region12: #{residual_stack_forward.7} parent=0 // pred_region
    _
  $region13: #{residual_stack_forward.7} parent=0 // pred_fallthru
    _
  // Predicated region
  $region14: #{residual_stack_forward.7} parent=0 // pred_check
    _
  $region15: #{residual_stack_forward.7} parent=0 // pred_check_branch
    %18 = sbr.rel (0) target = $region17
  $region16: #{residual_stack_forward.7} parent=0 // pred_region
    _
  $region17: #{residual_stack_forward.7} parent=0 // pred_fallthru
    _
  %v20 = vld [vmem:[%s0] sm:$0xf]
  %v21 = vld [vmem:[%s0 + $0x4] sm:$0xf]
  %v22 = vld [vmem:[%s0 + $0x8] sm:$0xf]
  %v23 = vld [vmem:[%s0 + $0xc] sm:$0xf]
  %v24 = vld [vmem:[%s0 + $0x10] sm:$0xf]
  %v25 = vld [vmem:[%s0 + $0x14] sm:$0xf]
  %v26 = vld [vmem:[%s0 + $0x18] sm:$0xf]
  %v27 = vld [vmem:[%s0 + $0x1c] sm:$0xf]
  %v28 = vld [vmem:[%s0 + $0x20] sm:$0xf]
  %v29 = vld [vmem:[%s0 + $0x24] sm:$0xf]
  %v30 = vld [vmem:[%s0 + $0x28] sm:$0xf]
  %v31 = vld [vmem:[%s0 + $0x2c] sm:$0xf]
  %v32 = vld [vmem:[%s0 + $0x30] sm:$0xf]
  %v33 = vld [vmem:[%s0 + $0x34] sm:$0xf]
  %v34 = vld [vmem:[%s0 + $0x38] sm:$0xf]
  %v35 = vld [vmem:[%s0 + $0x3c] sm:$0xf]
  %v36 = vunpack.c.l.bf16 %v20
  %v37 = vunpack.c.l.bf16 %v21
  %v38 = vunpack.c.l.bf16 %v22
  %v39 = vunpack.c.l.bf16 %v23
  %v40 = vunpack.c.l.bf16 %v24
  %v41 = vunpack.c.l.bf16 %v25
  %v42 = vunpack.c.l.bf16 %v26
  %v43 = vunpack.c.l.bf16 %v27
  %v44 = vunpack.c.l.bf16 %v28
  %v45 = vunpack.c.l.bf16 %v29
  %v46 = vunpack.c.l.bf16 %v30
  %v47 = vunpack.c.l.bf16 %v31
  %v48 = vunpack.c.l.bf16 %v32
  %v49 = vunpack.c.l.bf16 %v33
  %v50 = vunpack.c.l.bf16 %v34
  %v51 = vunpack.c.l.bf16 %v35
  %v52 = vld [vmem:[%s1] sm:$0x1]
  %v54 = vlaneseq
  %v55 = vshrl.u32 %v54, 7
  %v56 = vsub.s32 0, %v55
  %v57 = vrot.slane %v52, %v56
  %v59 = vmul.f32 %v36, %v57
  %v60 = vmul.f32 %v37, %v57
  %v61 = vmul.f32 %v38, %v57
  %v62 = vmul.f32 %v39, %v57
  %v63 = vmul.f32 %v40, %v57
  %v64 = vmul.f32 %v41, %v57
  %v65 = vmul.f32 %v42, %v57
  %v66 = vmul.f32 %v43, %v57
  %v67 = vmul.f32 %v44, %v57
  %v68 = vmul.f32 %v45, %v57
  %v69 = vmul.f32 %v46, %v57
  %v70 = vmul.f32 %v47, %v57
  %v71 = vmul.f32 %v48, %v57
  %v72 = vmul.f32 %v49, %v57
  %v73 = vmul.f32 %v50, %v57
  %v74 = vmul.f32 %v51, %v57
  %v75 = vld [vmem:[%s2] sm:$0x1]
  %v77 = vlaneseq
  %v78 = vshrl.u32 %v77, 7
  %v79 = vsub.s32 0, %v78
  %v80 = vrot.slane %v75, %v79
  %v82 = vadd.f32 %v59, %v80
  %v83 = vadd.f32 %v60, %v80
  %v84 = vadd.f32 %v61, %v80
  %v85 = vadd.f32 %v62, %v80
  %v86 = vadd.f32 %v63, %v80
  %v87 = vadd.f32 %v64, %v80
  %v88 = vadd.f32 %v65, %v80
  %v89 = vadd.f32 %v66, %v80
  %v90 = vadd.f32 %v67, %v80
  %v91 = vadd.f32 %v68, %v80
  %v92 = vadd.f32 %v69, %v80
  %v93 = vadd.f32 %v70, %v80
  %v94 = vadd.f32 %v71, %v80
  %v95 = vadd.f32 %v72, %v80
  %v96 = vadd.f32 %v73, %v80
  %v97 = vadd.f32 %v74, %v80
  %v98 = vmax.f32 %v82, 0.0
  %v99 = vmax.f32 %v83, 0.0
  %v100 = vmax.f32 %v84, 0.0
  %v101 = vmax.f32 %v85, 0.0
  %v102 = vmax.f32 %v86, 0.0
  %v103 = vmax.f32 %v87, 0.0
  %v104 = vmax.f32 %v88, 0.0
  %v105 = vmax.f32 %v89, 0.0
  %v106 = vmax.f32 %v90, 0.0
  %v107 = vmax.f32 %v91, 0.0
  %v108 = vmax.f32 %v92, 0.0
  %v109 = vmax.f32 %v93, 0.0
  %v110 = vmax.f32 %v94, 0.0
  %v111 = vmax.f32 %v95, 0.0
  %v112 = vmax.f32 %v96, 0.0
  %v113 = vmax.f32 %v97, 0.0
  %v114 = vpack.c.bf16 %v99, %v98
  %v115 = vpack.c.bf16 %v101, %v100
  %v116 = vpack.c.bf16 %v103, %v102
  %v117 = vpack.c.bf16 %v105, %v104
  %v118 = vpack.c.bf16 %v107, %v106
  %v119 = vpack.c.bf16 %v109, %v108
  %v120 = vpack.c.bf16 %v111, %v110
  %v121 = vpack.c.bf16 %v113, %v112
  %v122 = vld [vmem:[%s3] sm:$0xf]
  %v123 = vld [vmem:[%s3 + $0x4] sm:$0xf]
  %v126 = vunpack.c.l.b16 %v122
  %v127 = vunpack.c.l.b16 %v123
  %v128 = vpack.c.b16 %v127, %v126
  %vm130 = vcmask 130048
  %v132 = vsel %vm130, %v114, 0
  %v135 = vsel %vm130, %v115, 0
  %v138 = vsel %vm130, %v116, 0
  %v141 = vsel %vm130, %v117, 0
  %v144 = vsel %vm130, %v118, 0
  %v147 = vsel %vm130, %v119, 0
  %v150 = vsel %vm130, %v120, 0
  %v153 = vsel %vm130, %v121, 0
  %155 = vmatprep.subr.bf16.mxu0 0
  %156 = vmatpush1.bf16.msra.mxu0 %v128
  %157 = vmatprep.subr.bf16.mxu0 0
  %158 = vmatpush1.bf16.msra.mxu0 0
  %159 = vmatprep.subr.bf16.mxu0 0
  %160 = vmatpush1.bf16.msra.mxu0 0
  %161 = vmatprep.subr.bf16.mxu0 0
  %162 = vmatpush1.bf16.msra.mxu0 0
  %163 = vmatprep.subr.bf16.mxu0 0
  %164 = vmatpush1.bf16.msra.mxu0 0
  %165 = vmatprep.subr.bf16.mxu0 0
  %166 = vmatpush1.bf16.msra.mxu0 0
  %167 = vmatprep.subr.bf16.mxu0 0
  %168 = vmatpush1.bf16.msra.mxu0 0
  %169 = vmatprep.subr.bf16.mxu0 0
  %170 = vmatpush1.bf16.msra.mxu0 0
  %171 = vmatprep.subr.bf16.mxu0 0
  %172 = vmatpush1.bf16.msra.mxu0 0
  %173 = vmatprep.subr.bf16.mxu0 0
  %174 = vmatpush1.bf16.msra.mxu0 0
  %175 = vmatprep.subr.bf16.mxu0 0
  %176 = vmatpush1.bf16.msra.mxu0 0
  %177 = vmatprep.subr.bf16.mxu0 0
  %178 = vmatpush1.bf16.msra.mxu0 0
  %179 = vmatprep.subr.bf16.mxu0 0
  %180 = vmatpush1.bf16.msra.mxu0 0
  %181 = vmatprep.subr.bf16.mxu0 0
  %182 = vmatpush1.bf16.msra.mxu0 0
  %183 = vmatprep.subr.bf16.mxu0 0
  %184 = vmatpush1.bf16.msra.mxu0 0
  %185 = vmatprep.subr.bf16.mxu0 0
  %186 = vmatpush1.bf16.msra.mxu0 0
  %187 = vmatprep.mubr.bf16.mxu0 0
  %188 = vmatmul.mubr.bf16.gmra.mrb[0].mxu0 %v132
  %v189 = vpop.f32.mrb[0].mxu0
  %v190 = vadd.f32 0.0, %v189
  %v191 = vpop.f32.mrb[0].mxu0
  %v192 = vpop.f32.mrb[0].mxu0
  %v193 = vadd.f32 0.0, %v192
  %v194 = vpop.f32.mrb[0].mxu0
  %195 = vmatprep.mubr.bf16.mxu0 0
  %196 = vmatmul.mubr.bf16.gmra.mrb[0].mxu0 %v135
  %v197 = vpop.f32.mrb[0].mxu0
  %v198 = vadd.f32 0.0, %v197
  %v199 = vpop.f32.mrb[0].mxu0
  %v200 = vpop.f32.mrb[0].mxu0
  %v201 = vadd.f32 0.0, %v200
  %v202 = vpop.f32.mrb[0].mxu0
  %203 = vmatprep.mubr.bf16.mxu0 0
  %204 = vmatmul.mubr.bf16.gmra.mrb[0].mxu0 %v138
  %v205 = vpop.f32.mrb[0].mxu0
  %v206 = vadd.f32 0.0, %v205
  %v207 = vpop.f32.mrb[0].mxu0
  %v208 = vpop.f32.mrb[0].mxu0
  %v209 = vadd.f32 0.0, %v208
  %v210 = vpop.f32.mrb[0].mxu0
  %211 = vmatprep.mubr.bf16.mxu0 0
  %212 = vmatmul.mubr.bf16.gmra.mrb[0].mxu0 %v141
  %v213 = vpop.f32.mrb[0].mxu0
  %v214 = vadd.f32 0.0, %v213
  %v215 = vpop.f32.mrb[0].mxu0
  %v216 = vpop.f32.mrb[0].mxu0
  %v217 = vadd.f32 0.0, %v216
  %v218 = vpop.f32.mrb[0].mxu0
  %219 = vmatprep.mubr.bf16.mxu0 0
  %220 = vmatmul.mubr.bf16.gmra.mrb[0].mxu0 %v144
  %v221 = vpop.f32.mrb[0].mxu0
  %v222 = vadd.f32 0.0, %v221
  %v223 = vpop.f32.mrb[0].mxu0
  %v224 = vpop.f32.mrb[0].mxu0
  %v225 = vadd.f32 0.0, %v224
  %v226 = vpop.f32.mrb[0].mxu0
  %227 = vmatprep.mubr.bf16.mxu0 0
  %228 = vmatmul.mubr.bf16.gmra.mrb[0].mxu0 %v147
  %v229 = vpop.f32.mrb[0].mxu0
  %v230 = vadd.f32 0.0, %v229
  %v231 = vpop.f32.mrb[0].mxu0
  %v232 = vpop.f32.mrb[0].mxu0
  %v233 = vadd.f32 0.0, %v232
  %v234 = vpop.f32.mrb[0].mxu0
  %235 = vmatprep.mubr.bf16.mxu0 0
  %236 = vmatmul.mubr.bf16.gmra.mrb[0].mxu0 %v150
  %v237 = vpop.f32.mrb[0].mxu0
  %v238 = vadd.f32 0.0, %v237
  %v239 = vpop.f32.mrb[0].mxu0
  %v240 = vpop.f32.mrb[0].mxu0
  %v241 = vadd.f32 0.0, %v240
  %v242 = vpop.f32.mrb[0].mxu0
  %243 = vmatprep.mubr.bf16.mxu0 0
  %244 = vmatmul.mubr.bf16.gmra.mrb[0].mxu0 %v153
  %v245 = vpop.f32.mrb[0].mxu0
  %v246 = vadd.f32 0.0, %v245
  %v247 = vpop.f32.mrb[0].mxu0
  %v248 = vpop.f32.mrb[0].mxu0
  %v249 = vadd.f32 0.0, %v248
  %v250 = vpop.f32.mrb[0].mxu0
  %251 = vdwg.mxu0
  %v252 = vpack.c.bf16 %v193, %v190
  %v253 = vpack.c.bf16 %v201, %v198
  %v254 = vpack.c.bf16 %v209, %v206
  %v255 = vpack.c.bf16 %v217, %v214
  %v256 = vpack.c.bf16 %v225, %v222
  %v257 = vpack.c.bf16 %v233, %v230
  %v258 = vpack.c.bf16 %v241, %v238
  %v259 = vpack.c.bf16 %v249, %v246
  %v268 = vunpack.c.l.b16 %v252
  %v269 = vunpack.c.h.b16 %v252
  %v270 = vunpack.c.l.b16 %v253
  %v271 = vunpack.c.h.b16 %v253
  %v272 = vunpack.c.l.b16 %v254
  %v273 = vunpack.c.h.b16 %v254
  %v274 = vunpack.c.l.b16 %v255
  %v275 = vunpack.c.h.b16 %v255
  %v276 = vunpack.c.l.b16 %v256
  %v277 = vunpack.c.h.b16 %v256
  %v278 = vunpack.c.l.b16 %v257
  %v279 = vunpack.c.h.b16 %v257
  %v280 = vunpack.c.l.b16 %v258
  %v281 = vunpack.c.h.b16 %v258
  %v282 = vunpack.c.l.b16 %v259
  %v283 = vunpack.c.h.b16 %v259
  %v284 = vpack.c.b16 %v268, %v268
  %v285 = vpack.c.b16 %v269, %v269
  %v286 = vpack.c.b16 %v270, %v270
  %v287 = vpack.c.b16 %v271, %v271
  %v288 = vpack.c.b16 %v272, %v272
  %v289 = vpack.c.b16 %v273, %v273
  %v290 = vpack.c.b16 %v274, %v274
  %v291 = vpack.c.b16 %v275, %v275
  %v292 = vpack.c.b16 %v276, %v276
  %v293 = vpack.c.b16 %v277, %v277
  %v294 = vpack.c.b16 %v278, %v278
  %v295 = vpack.c.b16 %v279, %v279
  %v296 = vpack.c.b16 %v280, %v280
  %v297 = vpack.c.b16 %v281, %v281
  %v298 = vpack.c.b16 %v282, %v282
  %v299 = vpack.c.b16 %v283, %v283
  %vm316 = vcmask 257024
  %317 = vst.msk [vmem:[%s4] sm:$0xf] %vm316, %v284
  %318 = vst.msk [vmem:[%s4 + $0x4] sm:$0xf] %vm316, %v285
  %319 = vst.msk [vmem:[%s4 + $0x8] sm:$0xf] %vm316, %v286
  %320 = vst.msk [vmem:[%s4 + $0xc] sm:$0xf] %vm316, %v287
  %321 = vst.msk [vmem:[%s4 + $0x10] sm:$0xf] %vm316, %v288
  %322 = vst.msk [vmem:[%s4 + $0x14] sm:$0xf] %vm316, %v289
  %323 = vst.msk [vmem:[%s4 + $0x18] sm:$0xf] %vm316, %v290
  %324 = vst.msk [vmem:[%s4 + $0x1c] sm:$0xf] %vm316, %v291
  %325 = vst.msk [vmem:[%s4 + $0x20] sm:$0xf] %vm316, %v292
  %326 = vst.msk [vmem:[%s4 + $0x24] sm:$0xf] %vm316, %v293
  %327 = vst.msk [vmem:[%s4 + $0x28] sm:$0xf] %vm316, %v294
  %328 = vst.msk [vmem:[%s4 + $0x2c] sm:$0xf] %vm316, %v295
  %329 = vst.msk [vmem:[%s4 + $0x30] sm:$0xf] %vm316, %v296
  %330 = vst.msk [vmem:[%s4 + $0x34] sm:$0xf] %vm316, %v297
  %331 = vst.msk [vmem:[%s4 + $0x38] sm:$0xf] %vm316, %v298
  %332 = vst.msk [vmem:[%s4 + $0x3c] sm:$0xf] %vm316, %v299
  %vm333 = vcmask 261120
  %v334 = vsel %vm333, %v190, 0.0
  %v335 = vsel %vm333, %v193, 0.0
  %v336 = vadd.f32 %v334, %v335
  %v337 = vsel %vm333, %v198, 0.0
  %v338 = vadd.f32 %v336, %v337
  %v339 = vsel %vm333, %v201, 0.0
  %v340 = vadd.f32 %v338, %v339
  %v341 = vsel %vm333, %v206, 0.0
  %v342 = vadd.f32 %v340, %v341
  %v343 = vsel %vm333, %v209, 0.0
  %v344 = vadd.f32 %v342, %v343
  %v345 = vsel %vm333, %v214, 0.0
  %v346 = vadd.f32 %v344, %v345
  %v347 = vsel %vm333, %v217, 0.0
  %v348 = vadd.f32 %v346, %v347
  %v349 = vsel %vm333, %v222, 0.0
  %v350 = vadd.f32 %v348, %v349
  %v351 = vsel %vm333, %v225, 0.0
  %v352 = vadd.f32 %v350, %v351
  %v353 = vsel %vm333, %v230, 0.0
  %v354 = vadd.f32 %v352, %v353
  %v355 = vsel %vm333, %v233, 0.0
  %v356 = vadd.f32 %v354, %v355
  %v357 = vsel %vm333, %v238, 0.0
  %v358 = vadd.f32 %v356, %v357
  %v359 = vsel %vm333, %v241, 0.0
  %v360 = vadd.f32 %v358, %v359
  %v361 = vsel %vm333, %v246, 0.0
  %v362 = vadd.f32 %v360, %v361
  %v363 = vsel %vm333, %v249, 0.0
  %v364 = vadd.f32 %v362, %v363
  %v365 = vrot.slane %v364, 4
  %v366 = vadd.f32 %v364, %v365
  %v367 = vrot.slane %v366, 2
  %v368 = vadd.f32 %v366, %v367
  %v369 = vrot.slane %v368, 1
  %v370 = vadd.f32 %v368, %v369
  %v371 = vmul.f32 %v190, %v190
  %v372 = vmul.f32 %v193, %v193
  %v373 = vmul.f32 %v198, %v198
  %v374 = vmul.f32 %v201, %v201
  %v375 = vmul.f32 %v206, %v206
  %v376 = vmul.f32 %v209, %v209
  %v377 = vmul.f32 %v214, %v214
  %v378 = vmul.f32 %v217, %v217
  %v379 = vmul.f32 %v222, %v222
  %v380 = vmul.f32 %v225, %v225
  %v381 = vmul.f32 %v230, %v230
  %v382 = vmul.f32 %v233, %v233
  %v383 = vmul.f32 %v238, %v238
  %v384 = vmul.f32 %v241, %v241
  %v385 = vmul.f32 %v246, %v246
  %v386 = vmul.f32 %v249, %v249
  %v387 = vsel %vm333, %v371, 0.0
  %v388 = vsel %vm333, %v372, 0.0
  %v389 = vadd.f32 %v387, %v388
  %v390 = vsel %vm333, %v373, 0.0
  %v391 = vadd.f32 %v389, %v390
  %v392 = vsel %vm333, %v374, 0.0
  %v393 = vadd.f32 %v391, %v392
  %v394 = vsel %vm333, %v375, 0.0
  %v395 = vadd.f32 %v393, %v394
  %v396 = vsel %vm333, %v376, 0.0
  %v397 = vadd.f32 %v395, %v396
  %v398 = vsel %vm333, %v377, 0.0
  %v399 = vadd.f32 %v397, %v398
  %v400 = vsel %vm333, %v378, 0.0
  %v401 = vadd.f32 %v399, %v400
  %v402 = vsel %vm333, %v379, 0.0
  %v403 = vadd.f32 %v401, %v402
  %v404 = vsel %vm333, %v380, 0.0
  %v405 = vadd.f32 %v403, %v404
  %v406 = vsel %vm333, %v381, 0.0
  %v407 = vadd.f32 %v405, %v406
  %v408 = vsel %vm333, %v382, 0.0
  %v409 = vadd.f32 %v407, %v408
  %v410 = vsel %vm333, %v383, 0.0
  %v411 = vadd.f32 %v409, %v410
  %v412 = vsel %vm333, %v384, 0.0
  %v413 = vadd.f32 %v411, %v412
  %v414 = vsel %vm333, %v385, 0.0
  %v415 = vadd.f32 %v413, %v414
  %v416 = vsel %vm333, %v386, 0.0
  %v417 = vadd.f32 %v415, %v416
  %v418 = vrot.slane %v417, 4
  %v419 = vadd.f32 %v417, %v418
  %v420 = vrot.slane %v419, 2
  %v421 = vadd.f32 %v419, %v420
  %v422 = vrot.slane %v421, 1
  %v423 = vadd.f32 %v421, %v422
  %vm424 = vcmask 1040384
  %v425 = vsel %vm424, %v370, %v423
  %vm426 = vcmask 254976
  %427 = vst.msk [vmem:[%s5] sm:$0x3] %vm426, %v425
  // Predicated region
  $region18: #{residual_stack_forward.7} parent=0 // pred_check
    _
  $region19: #{residual_stack_forward.7} parent=0 // pred_check_branch
    %429 = sbr.rel (0) target = $region21
  $region20: #{residual_stack_forward.7} parent=0 // pred_region
    _
  $region21: #{residual_stack_forward.7} parent=0 // pred_fallthru
    _
  // Predicated region
  $region22: #{residual_stack_forward.7} parent=0 // pred_check
    _
  $region23: #{residual_stack_forward.7} parent=0 // pred_check_branch
    %431 = sbr.rel (0) target = $region25
  $region24: #{residual_stack_forward.7} parent=0 // pred_region
    _
  $region25: #{residual_stack_forward.7} parent=0 // pred_fallthru
    _
  // Predicated region
  $region26: #{residual_stack_forward.7} parent=0 // pred_check
    _
  $region27: #{residual_stack_forward.7} parent=0 // pred_check_branch
    %433 = sbr.rel (0) target = $region29
  $region28: #{residual_stack_forward.7} parent=0 // pred_region
    _
  $region29: #{residual_stack_forward.7} parent=0 // pred_fallthru
    _
  // Predicated region
  $region30: #{residual_stack_forward.7} parent=0 // pred_check
    _
  $region31: #{residual_stack_forward.7} parent=0 // pred_check_branch
    %435 = sbr.rel (0) target = $region33
  $region32: #{residual_stack_forward.7} parent=0 // pred_region
    _
  $region33: #{residual_stack_forward.7} parent=0 // pred_fallthru
    _

// kernel: residual_stack_forward.11
$region0: #{residual_stack_forward.11}
  #allocation0 [shape = 'u32[]', space=smem, size = 0x4, offset = 0x4, fixed_abs, tag = 'smem constant byte address 0x4 - core index']
  #allocation1 [shape = 'u32[144,128]{1,0:T(1,128)}', space=vmem, size = 0x12000, scoped, tag = 'internal scratch']
  %s0 = inlined_call_operand.vmem [shape: f32[128,32], index: 0, kind: input, shape index: {}]
  %s1 = inlined_call_operand.vmem [shape: bf16[128,32], index: 1, kind: input, shape index: {}]
  %s2 = inlined_call_operand.vmem [shape: f32[1,32], index: 2, kind: input, shape index: {}]
  %s3 = inlined_call_operand.vmem [shape: f32[1,32], index: 3, kind: input, shape index: {}]
  %s4 = inlined_call_operand.hbm [shape: f32[128,32], index: 4, kind: output, shape index: {}]
  %s5 = sld [smem:[#allocation0]]
  $region26: #{residual_stack_forward.11} parent=0
    _
  %s7 = ssub.s32 1, %s5
  %s8 = scalar_select 0, %s7, %s5
  $region1: #{residual_stack_forward.11} parent=0
    #allocation2 [shape = 'u8[65536]{0}', space=vmem, size = 0x10000, scoped, tag = 'output window, operand 0, single buffered']
    #allocation3 [shape = 's32[1]{0}', space=sflag, size = 0x4, scoped, tag = 'scoped memory for residual_stack_forward.11']
    %9 = vsyncpa [#allocation3], 0
    // Predicated region
    $region2: #{residual_stack_forward.11} parent=1 // pred_check
      _
    $region3: #{residual_stack_forward.11} parent=1 // pred_check_branch
      %11 = sbr.rel (0) target = $region5
    $region4: #{residual_stack_forward.11} parent=1 // pred_region
      _
    $region5: #{residual_stack_forward.11} parent=1 // pred_fallthru
      _
    // Predicated region
    $region6: #{residual_stack_forward.11} parent=1 // pred_check
      _
    $region7: #{residual_stack_forward.11} parent=1 // pred_check_branch
      %13 = sbr.rel (0) target = $region9
    $region8: #{residual_stack_forward.11} parent=1 // pred_region
      _
    $region9: #{residual_stack_forward.11} parent=1 // pred_fallthru
      _
    // Predicated region
    $region10: #{residual_stack_forward.11} parent=1 // pred_check
      _
    $region11: #{residual_stack_forward.11} parent=1 // pred_check_branch
      %15 = sbr.rel (0) target = $region13
    $region12: #{residual_stack_forward.11} parent=1 // pred_region
      _
    $region13: #{residual_stack_forward.11} parent=1 // pred_fallthru
      _
    // Predicated region
    $region14: #{residual_stack_forward.11} parent=1 // pred_check
      _
    $region15: #{residual_stack_forward.11} parent=1 // pred_check_branch
      %17 = sbr.rel (0) target = $region17
    $region16: #{residual_stack_forward.11} parent=1 // pred_region
      _
    $region17: #{residual_stack_forward.11} parent=1 // pred_fallthru
      _
    %v18 = vld [vmem:[%s1] sm:$0xf]
    %v19 = vld [vmem:[%s1 + $0x4] sm:$0xf]
    %v20 = vld [vmem:[%s1 + $0x8] sm:$0xf]
    %v21 = vld [vmem:[%s1 + $0xc] sm:$0xf]
    %v22 = vld [vmem:[%s1 + $0x10] sm:$0xf]
    %v23 = vld [vmem:[%s1 + $0x14] sm:$0xf]
    %v24 = vld [vmem:[%s1 + $0x18] sm:$0xf]
    %v25 = vld [vmem:[%s1 + $0x1c] sm:$0xf]
    %v26 = vld [vmem:[%s1 + $0x20] sm:$0xf]
    %v27 = vld [vmem:[%s1 + $0x24] sm:$0xf]
    %v28 = vld [vmem:[%s1 + $0x28] sm:$0xf]
    %v29 = vld [vmem:[%s1 + $0x2c] sm:$0xf]
    %v30 = vld [vmem:[%s1 + $0x30] sm:$0xf]
    %v31 = vld [vmem:[%s1 + $0x34] sm:$0xf]
    %v32 = vld [vmem:[%s1 + $0x38] sm:$0xf]
    %v33 = vld [vmem:[%s1 + $0x3c] sm:$0xf]
    %v34 = vunpack.c.l.bf16 %v18
    %v35 = vunpack.c.l.bf16 %v19
    %v36 = vunpack.c.l.bf16 %v20
    %v37 = vunpack.c.l.bf16 %v21
    %v38 = vunpack.c.l.bf16 %v22
    %v39 = vunpack.c.l.bf16 %v23
    %v40 = vunpack.c.l.bf16 %v24
    %v41 = vunpack.c.l.bf16 %v25
    %v42 = vunpack.c.l.bf16 %v26
    %v43 = vunpack.c.l.bf16 %v27
    %v44 = vunpack.c.l.bf16 %v28
    %v45 = vunpack.c.l.bf16 %v29
    %v46 = vunpack.c.l.bf16 %v30
    %v47 = vunpack.c.l.bf16 %v31
    %v48 = vunpack.c.l.bf16 %v32
    %v49 = vunpack.c.l.bf16 %v33
    %v50 = vld [vmem:[%s2] sm:$0x1]
    %v52 = vlaneseq
    %v53 = vshrl.u32 %v52, 7
    %v54 = vsub.s32 0, %v53
    %v55 = vrot.slane %v50, %v54
    %v57 = vmul.f32 %v34, %v55
    %v58 = vmul.f32 %v35, %v55
    %v59 = vmul.f32 %v36, %v55
    %v60 = vmul.f32 %v37, %v55
    %v61 = vmul.f32 %v38, %v55
    %v62 = vmul.f32 %v39, %v55
    %v63 = vmul.f32 %v40, %v55
    %v64 = vmul.f32 %v41, %v55
    %v65 = vmul.f32 %v42, %v55
    %v66 = vmul.f32 %v43, %v55
    %v67 = vmul.f32 %v44, %v55
    %v68 = vmul.f32 %v45, %v55
    %v69 = vmul.f32 %v46, %v55
    %v70 = vmul.f32 %v47, %v55
    %v71 = vmul.f32 %v48, %v55
    %v72 = vmul.f32 %v49, %v55
    %v73 = vld [vmem:[%s3] sm:$0x1]
    %v75 = vlaneseq
    %v76 = vshrl.u32 %v75, 7
    %v77 = vsub.s32 0, %v76
    %v78 = vrot.slane %v73, %v77
    %v80 = vadd.f32 %v57, %v78
    %v81 = vadd.f32 %v58, %v78
    %v82 = vadd.f32 %v59, %v78
    %v83 = vadd.f32 %v60, %v78
    %v84 = vadd.f32 %v61, %v78
    %v85 = vadd.f32 %v62, %v78
    %v86 = vadd.f32 %v63, %v78
    %v87 = vadd.f32 %v64, %v78
    %v88 = vadd.f32 %v65, %v78
    %v89 = vadd.f32 %v66, %v78
    %v90 = vadd.f32 %v67, %v78
    %v91 = vadd.f32 %v68, %v78
    %v92 = vadd.f32 %v69, %v78
    %v93 = vadd.f32 %v70, %v78
    %v94 = vadd.f32 %v71, %v78
    %v95 = vadd.f32 %v72, %v78
    %v96 = vld [vmem:[%s0] sm:$0xff]
    %v97 = vld [vmem:[%s0 + $0x8] sm:$0xff]
    %v98 = vld [vmem:[%s0 + $0x10] sm:$0xff]
    %v99 = vld [vmem:[%s0 + $0x18] sm:$0xff]
    %v100 = vld [vmem:[%s0 + $0x20] sm:$0xff]
    %v101 = vld [vmem:[%s0 + $0x28] sm:$0xff]
    %v102 = vld [vmem:[%s0 + $0x30] sm:$0xff]
    %v103 = vld [vmem:[%s0 + $0x38] sm:$0xff]
    %v104 = vld [vmem:[%s0 + $0x40] sm:$0xff]
    %v105 = vld [vmem:[%s0 + $0x48] sm:$0xff]
    %v106 = vld [vmem:[%s0 + $0x50] sm:$0xff]
    %v107 = vld [vmem:[%s0 + $0x58] sm:$0xff]
    %v108 = vld [vmem:[%s0 + $0x60] sm:$0xff]
    %v109 = vld [vmem:[%s0 + $0x68] sm:$0xff]
    %v110 = vld [vmem:[%s0 + $0x70] sm:$0xff]
    %v111 = vld [vmem:[%s0 + $0x78] sm:$0xff]
    %v112 = vadd.f32 %v96, %v80
    %v113 = vadd.f32 %v97, %v81
    %v114 = vadd.f32 %v98, %v82
    %v115 = vadd.f32 %v99, %v83
    %v116 = vadd.f32 %v100, %v84
    %v117 = vadd.f32 %v101, %v85
    %v118 = vadd.f32 %v102, %v86
    %v119 = vadd.f32 %v103, %v87
    %v120 = vadd.f32 %v104, %v88
    %v121 = vadd.f32 %v105, %v89
    %v122 = vadd.f32 %v106, %v90
    %v123 = vadd.f32 %v107, %v91
    %v124 = vadd.f32 %v108, %v92
    %v125 = vadd.f32 %v109, %v93
    %v126 = vadd.f32 %v110, %v94
    %v127 = vadd.f32 %v111, %v95
    %v128 = vmax.f32 %v112, 0.0
    %v129 = vmax.f32 %v113, 0.0
    %v130 = vmax.f32 %v114, 0.0
    %v131 = vmax.f32 %v115, 0.0
    %v132 = vmax.f32 %v116, 0.0
    %v133 = vmax.f32 %v117, 0.0
    %v134 = vmax.f32 %v118, 0.0
    %v135 = vmax.f32 %v119, 0.0
    %v136 = vmax.f32 %v120, 0.0
    %v137 = vmax.f32 %v121, 0.0
    %v138 = vmax.f32 %v122, 0.0
    %v139 = vmax.f32 %v123, 0.0
    %v140 = vmax.f32 %v124, 0.0
    %v141 = vmax.f32 %v125, 0.0
    %v142 = vmax.f32 %v126, 0.0
    %v143 = vmax.f32 %v127, 0.0
    %vm144 = vcmask 261120
    %145 = vst.msk [vmem:[#allocation2] sm:$0xff] %vm144, %v128
    %146 = vst.msk [vmem:[#allocation2 + $0x8] sm:$0xff] %vm144, %v129
    %147 = vst.msk [vmem:[#allocation2 + $0x10] sm:$0xff] %vm144, %v130
    %148 = vst.msk [vmem:[#allocation2 + $0x18] sm:$0xff] %vm144, %v131
    %149 = vst.msk [vmem:[#allocation2 + $0x20] sm:$0xff] %vm144, %v132
    %150 = vst.msk [vmem:[#allocation2 + $0x28] sm:$0xff] %vm144, %v133
    %151 = vst.msk [vmem:[#allocation2 + $0x30] sm:$0xff] %vm144, %v134
    %152 = vst.msk [vmem:[#allocation2 + $0x38] sm:$0xff] %vm144, %v135
    %153 = vst.msk [vmem:[#allocation2 + $0x40] sm:$0xff] %vm144, %v136
    %154 = vst.msk [vmem:[#allocation2 + $0x48] sm:$0xff] %vm144, %v137
    %155 = vst.msk [vmem:[#allocation2 + $0x50] sm:$0xff] %vm144, %v138
    %156 = vst.msk [vmem:[#allocation2 + $0x58] sm:$0xff] %vm144, %v139
    %157 = vst.msk [vmem:[#allocation2 + $0x60] sm:$0xff] %vm144, %v140
    %158 = vst.msk [vmem:[#allocation2 + $0x68] sm:$0xff] %vm144, %v141
    %159 = vst.msk [vmem:[#allocation2 + $0x70] sm:$0xff] %vm144, %v142
    %160 = vst.msk [vmem:[#allocation2 + $0x78] sm:$0xff] %vm144, %v143
    // Predicated region
    $region18: #{residual_stack_forward.11} parent=1 // pred_check
      _
    $region19: #{residual_stack_forward.11} parent=1 // pred_check_branch
      %162 = sbr.rel (0) target = $region21
    $region20: #{residual_stack_forward.11} parent=1 // pred_region
      %s164 = ssub.s32 2048, 2048
      %165 = vsyncadd [#allocation3], %s164
      %s166 = sshll.u32 [#allocation2], 4
      %s167 = int_to_ptr.vmem [resolvable:$true] %s166
      %172 = dma.vmem_to_hbm [thread:$0]  %s167, 2048, %s4, [#allocation3], 128, 128, 8
    $region21: #{residual_stack_forward.11} parent=1 // pred_fallthru
      _
    // Predicated region
    $region22: #{residual_stack_forward.11} parent=1 // pred_check
      _
    $region23: #{residual_stack_forward.11} parent=1 // pred_check_branch
      %174 = sbr.rel (0) target = $region25
    $region24: #{residual_stack_forward.11} parent=1 // pred_region
      %175 = dma.done [#allocation3], 2048
    $region25: #{residual_stack_forward.11} parent=1 // pred_fallthru
      _
    %176 = vsyncpa [#allocation3], 1

// kernel: residual_stack_forward.6
$region0: #{residual_stack_forward.6}
  #allocation0 [shape = 'u32[]', space=smem, size = 0x4, offset = 0x4, fixed_abs, tag = 'smem constant byte address 0x4 - core index']
  #allocation1 [shape = 'u32[144,128]{1,0:T(1,128)}', space=vmem, size = 0x12000, scoped, tag = 'internal scratch']
  #allocation2 [shape = 'f32[2,10,10,32]{3,2,1,0:T(8,128)}', space=vmem, size = 0x28000, scoped, tag = 'scratch operand']
  %s0 = inlined_call_operand.vmem [shape: f32[2,8,8,32], index: 0, kind: input, shape index: {}]
  %s1 = inlined_call_operand.vmem [shape: bf16[288,16], index: 1, kind: input, shape index: {}]
  %s2 = inlined_call_operand.vmem [shape: bf16[128,16], index: 2, kind: output, shape index: {0}]
  %s3 = inlined_call_operand.vmem [shape: f32[1,2,16], index: 3, kind: output, shape index: {1}]
  %4 = xla_tuple %s2, %s3
  %s5 = sld [smem:[#allocation0]]
  $region26: #{residual_stack_forward.6} parent=0
    _
  %s7 = ssub.s32 1, %s5
  %s8 = scalar_select 0, %s7, %s5
  // Predicated region
  $region2: #{residual_stack_forward.6} parent=0 // pred_check
    _
  $region3: #{residual_stack_forward.6} parent=0 // pred_check_branch
    %10 = sbr.rel (0) target = $region5
  $region4: #{residual_stack_forward.6} parent=0 // pred_region
    _
  $region5: #{residual_stack_forward.6} parent=0 // pred_fallthru
    _
  // Predicated region
  $region6: #{residual_stack_forward.6} parent=0 // pred_check
    _
  $region7: #{residual_stack_forward.6} parent=0 // pred_check_branch
    %12 = sbr.rel (0) target = $region9
  $region8: #{residual_stack_forward.6} parent=0 // pred_region
    _
  $region9: #{residual_stack_forward.6} parent=0 // pred_fallthru
    _
  %vm14 = vcmask 253952
  %15 = vst.msk [vmem:[#allocation2] sm:$0x1] %vm14, 0.0
  %16 = vst.msk [vmem:[#allocation2 + $0x10] sm:$0x1] %vm14, 0.0
  %17 = vst.msk [vmem:[#allocation2 + $0x20] sm:$0x1] %vm14, 0.0
  %18 = vst.msk [vmem:[#allocation2 + $0x30] sm:$0x1] %vm14, 0.0
  %19 = vst.msk [vmem:[#allocation2 + $0x40] sm:$0x1] %vm14, 0.0
  %20 = vst.msk [vmem:[#allocation2 + $0x50] sm:$0x1] %vm14, 0.0
  %21 = vst.msk [vmem:[#allocation2 + $0x60] sm:$0x1] %vm14, 0.0
  %22 = vst.msk [vmem:[#allocation2 + $0x70] sm:$0x1] %vm14, 0.0
  %23 = vst.msk [vmem:[#allocation2 + $0x80] sm:$0x1] %vm14, 0.0
  %24 = vst.msk [vmem:[#allocation2 + $0x90] sm:$0x1] %vm14, 0.0
  %25 = vst.msk [vmem:[#allocation2 + $0xa0] sm:$0x1] %vm14, 0.0
  %26 = vst.msk [vmem:[#allocation2 + $0xb0] sm:$0x1] %vm14, 0.0
  %27 = vst.msk [vmem:[#allocation2 + $0xc0] sm:$0x1] %vm14, 0.0
  %28 = vst.msk [vmem:[#allocation2 + $0xd0] sm:$0x1] %vm14, 0.0
  %29 = vst.msk [vmem:[#allocation2 + $0xe0] sm:$0x1] %vm14, 0.0
  %30 = vst.msk [vmem:[#allocation2 + $0xf0] sm:$0x1] %vm14, 0.0
  %31 = vst.msk [vmem:[#allocation2 + $0x100] sm:$0x1] %vm14, 0.0
  %32 = vst.msk [vmem:[#allocation2 + $0x110] sm:$0x1] %vm14, 0.0
  %33 = vst.msk [vmem:[#allocation2 + $0x120] sm:$0x1] %vm14, 0.0
  %34 = vst.msk [vmem:[#allocation2 + $0x130] sm:$0x1] %vm14, 0.0
  %35 = vst.msk [vmem:[#allocation2 + $0x9] sm:$0x1] %vm14, 0.0
  %36 = vst.msk [vmem:[#allocation2 + $0x19] sm:$0x1] %vm14, 0.0
  %37 = vst.msk [vmem:[#allocation2 + $0x29] sm:$0x1] %vm14, 0.0
  %38 = vst.msk [vmem:[#allocation2 + $0x39] sm:$0x1] %vm14, 0.0
  %39 = vst.msk [vmem:[#allocation2 + $0x49] sm:$0x1] %vm14, 0.0
  %40 = vst.msk [vmem:[#allocation2 + $0x59] sm:$0x1] %vm14, 0.0
  %41 = vst.msk [vmem:[#allocation2 + $0x69] sm:$0x1] %vm14, 0.0
  %42 = vst.msk [vmem:[#allocation2 + $0x79] sm:$0x1] %vm14, 0.0
  %43 = vst.msk [vmem:[#allocation2 + $0x89] sm:$0x1] %vm14, 0.0
  %44 = vst.msk [vmem:[#allocation2 + $0x99] sm:$0x1] %vm14, 0.0
  %45 = vst.msk [vmem:[#allocation2 + $0xa9] sm:$0x1] %vm14, 0.0
  %46 = vst.msk [vmem:[#allocation2 + $0xb9] sm:$0x1] %vm14, 0.0
  %47 = vst.msk [vmem:[#allocation2 + $0xc9] sm:$0x1] %vm14, 0.0
  %48 = vst.msk [vmem:[#allocation2 + $0xd9] sm:$0x1] %vm14, 0.0
  %49 = vst.msk [vmem:[#allocation2 + $0xe9] sm:$0x1] %vm14, 0.0
  %50 = vst.msk [vmem:[#allocation2 + $0xf9] sm:$0x1] %vm14, 0.0
  %51 = vst.msk [vmem:[#allocation2 + $0x109] sm:$0x1] %vm14, 0.0
  %52 = vst.msk [vmem:[#allocation2 + $0x119] sm:$0x1] %vm14, 0.0
  %53 = vst.msk [vmem:[#allocation2 + $0x129] sm:$0x1] %vm14, 0.0
  %54 = vst.msk [vmem:[#allocation2 + $0x139] sm:$0x1] %vm14, 0.0
  %vm55 = vcmask 261120
  %56 = vst.msk [vmem:[#allocation2] sm:$0xff] %vm55, 0.0
  %vm57 = vcmask 254976
  %58 = vst.msk [vmem:[#allocation2 + $0x8] sm:$0x3] %vm57, 0.0
  %59 = vst.msk [vmem:[#allocation2 + $0xa0] sm:$0xff] %vm55, 0.0
  %60 = vst.msk [vmem:[#allocation2 + $0xa8] sm:$0x3] %vm57, 0.0
  %s61 = scalar_lea.vmem [#allocation2], 144
  %62 = vst.msk [vmem:[%s61] sm:$0xff] %vm55, 0.0
  %63 = vst.msk [vmem:[%s61 + $0x8] sm:$0x3] %vm57, 0.0
  %64 = vst.msk [vmem:[%s61 + $0xa0] sm:$0xff] %vm55, 0.0
  %65 = vst.msk [vmem:[%s61 + $0xa8] sm:$0x3] %vm57, 0.0
  %v66 = vld [vmem:[%s0] sm:$0xff]
  %v67 = vld [vmem:[%s0 + $0x8] sm:$0xff]
  %v68 = vld [vmem:[%s0 + $0x10] sm:$0xff]
  %v69 = vld [vmem:[%s0 + $0x18] sm:$0xff]
  %v70 = vld [vmem:[%s0 + $0x20] sm:$0xff]
  %v71 = vld [vmem:[%s0 + $0x28] sm:$0xff]
  %v72 = vld [vmem:[%s0 + $0x30] sm:$0xff]
  %v73 = vld [vmem:[%s0 + $0x38] sm:$0xff]
  %v74 = vld [vmem:[%s0 + $0x40] sm:$0xff]
  %v75 = vld [vmem:[%s0 + $0x48] sm:$0xff]
  %v76 = vld [vmem:[%s0 + $0x50] sm:$0xff]
  %v77 = vld [vmem:[%s0 + $0x58] sm:$0xff]
  %v78 = vld [vmem:[%s0 + $0x60] sm:$0xff]
  %v79 = vld [vmem:[%s0 + $0x68] sm:$0xff]
  %v80 = vld [vmem:[%s0 + $0x70] sm:$0xff]
  %v81 = vld [vmem:[%s0 + $0x78] sm:$0xff]
  %v82 = vmax.f32 %v66, 0.0
  %v83 = vmax.f32 %v67, 0.0
  %v84 = vmax.f32 %v68, 0.0
  %v85 = vmax.f32 %v69, 0.0
  %v86 = vmax.f32 %v70, 0.0
  %v87 = vmax.f32 %v71, 0.0
  %v88 = vmax.f32 %v72, 0.0
  %v89 = vmax.f32 %v73, 0.0
  %v90 = vmax.f32 %v74, 0.0
  %v91 = vmax.f32 %v75, 0.0
  %v92 = vmax.f32 %v76, 0.0
  %v93 = vmax.f32 %v77, 0.0
  %v94 = vmax.f32 %v78, 0.0
  %v95 = vmax.f32 %v79, 0.0
  %v96 = vmax.f32 %v80, 0.0
  %v97 = vmax.f32 %v81, 0.0
  %s98 = scalar_lea.vmem [#allocation2], 16
  %99 = vst.msk [vmem:[%s98 + $0x1] sm:$0xff] %vm55, %v82
  %100 = vst.msk [vmem:[%s98 + $0x11] sm:$0xff] %vm55, %v83
  %101 = vst.msk [vmem:[%s98 + $0x21] sm:$0xff] %vm55, %v84
  %102 = vst.msk [vmem:[%s98 + $0x31] sm:$0xff] %vm55, %v85
  %103 = vst.msk [vmem:[%s98 + $0x41] sm:$0xff] %vm55, %v86
  %104 = vst.msk [vmem:[%s98 + $0x51] sm:$0xff] %vm55, %v87
  %105 = vst.msk [vmem:[%s98 + $0x61] sm:$0xff] %vm55, %v88
  %106 = vst.msk [vmem:[%s98 + $0x71] sm:$0xff] %vm55, %v89
  %107 = vst.msk [vmem:[%s98 + $0xa1] sm:$0xff] %vm55, %v90
  %108 = vst.msk [vmem:[%s98 + $0xb1] sm:$0xff] %vm55, %v91
  %109 = vst.msk [vmem:[%s98 + $0xc1] sm:$0xff] %vm55, %v92
  %110 = vst.msk [vmem:[%s98 + $0xd1] sm:$0xff] %vm55, %v93
  %111 = vst.msk [vmem:[%s98 + $0xe1] sm:$0xff] %vm55, %v94
  %112 = vst.msk [vmem:[%s98 + $0xf1] sm:$0xff] %vm55, %v95
  %113 = vst.msk [vmem:[%s98 + $0x101] sm:$0xff] %vm55, %v96
  %114 = vst.msk [vmem:[%s98 + $0x111] sm:$0xff] %vm55, %v97
  %v115 = vld [vmem:[#allocation2] sm:$0xff]
  %v116 = vld [vmem:[#allocation2 + $0x8] sm:$0x3]
  %v117 = vld [vmem:[#allocation2 + $0x10] sm:$0xff]
  %v118 = vld [vmem:[#allocation2 + $0x18] sm:$0x3]
  %v119 = vld [vmem:[#allocation2 + $0x20] sm:$0xff]
  %v120 = vld [vmem:[#allocation2 + $0x28] sm:$0x3]
  %v121 = vld [vmem:[#allocation2 + $0x30] sm:$0xff]
  %v122 = vld [vmem:[#allocation2 + $0x38] sm:$0x3]
  %v123 = vld [vmem:[#allocation2 + $0x40] sm:$0xff]
  %v124 = vld [vmem:[#allocation2 + $0x48] sm:$0x3]
  %v125 = vld [vmem:[#allocation2 + $0x50] sm:$0xff]
  %v126 = vld [vmem:[#allocation2 + $0x58] sm:$0x3]
  %v127 = vld [vmem:[#allocation2 + $0x60] sm:$0xff]
  %v128 = vld [vmem:[#allocation2 + $0x68] sm:$0x3]
  %v129 = vld [vmem:[#allocation2 + $0x70] sm:$0xff]
  %v130 = vld [vmem:[#allocation2 + $0x78] sm:$0x3]
  %v131 = vld [vmem:[#allocation2 + $0x80] sm:$0xff]
  %v132 = vld [vmem:[#allocation2 + $0x88] sm:$0x3]
  %v133 = vld [vmem:[#allocation2 + $0x90] sm:$0xff]
  %v134 = vld [vmem:[#allocation2 + $0x98] sm:$0x3]
  %v135 = vld [vmem:[#allocation2 + $0xa0] sm:$0xff]
  %v136 = vld [vmem:[#allocation2 + $0xa8] sm:$0x3]
  %v137 = vld [vmem:[#allocation2 + $0xb0] sm:$0xff]
  %v138 = vld [vmem:[#allocation2 + $0xb8] sm:$0x3]
  %v139 = vld [vmem:[#allocation2 + $0xc0] sm:$0xff]
  %v140 = vld [vmem:[#allocation2 + $0xc8] sm:$0x3]
  %v141 = vld [vmem:[#allocation2 + $0xd0] sm:$0xff]
  %v142 = vld [vmem:[#allocation2 + $0xd8] sm:$0x3]
  %v143 = vld [vmem:[#allocation2 + $0xe0] sm:$0xff]
  %v144 = vld [vmem:[#allocation2 + $0xe8] sm:$0x3]
  %v145 = vld [vmem:[#allocation2 + $0xf0] sm:$0xff]
  %v146 = vld [vmem:[#allocation2 + $0xf8] sm:$0x3]
  %v147 = vld [vmem:[#allocation2 + $0x100] sm:$0xff]
  %v148 = vld [vmem:[#allocation2 + $0x108] sm:$0x3]
  %v149 = vld [vmem:[#allocation2 + $0x110] sm:$0xff]
  %v150 = vld [vmem:[#allocation2 + $0x118] sm:$0x3]
  %v151 = vld [vmem:[#allocation2 + $0x120] sm:$0xff]
  %v152 = vld [vmem:[#allocation2 + $0x128] sm:$0x3]
  %v153 = vld [vmem:[#allocation2 + $0x130] sm:$0xff]
  %v154 = vld [vmem:[#allocation2 + $0x138] sm:$0x3]
  %vm187 = vcmask 1046528
  %v188 = vrot.slane %v115, 1
  %v189 = vrot.slane %v116, 1
  %v190 = vsel %vm187, %v188, %v189
  %v191 = vrot.slane %v117, 1
  %v192 = vrot.slane %v118, 1
  %v193 = vsel %vm187, %v191, %v192
  %v194 = vrot.slane %v119, 1
  %v195 = vrot.slane %v120, 1
  %v196 = vsel %vm187, %v194, %v195
  %v197 = vrot.slane %v121, 1
  %v198 = vrot.slane %v122, 1
  %v199 = vsel %vm187, %v197, %v198
  %v200 = vrot.slane %v123, 1
  %v201 = vrot.slane %v124, 1
  %v202 = vsel %vm187, %v200, %v201
  %v203 = vrot.slane %v125, 1
  %v204 = vrot.slane %v126, 1
  %v205 = vsel %vm187, %v203, %v204
  %v206 = vrot.slane %v127, 1
  %v207 = vrot.slane %v128, 1
  %v208 = vsel %vm187, %v206, %v207
  %v209 = vrot.slane %v129, 1
  %v210 = vrot.slane %v130, 1
  %v211 = vsel %vm187, %v209, %v210
  %v212 = vrot.slane %v135, 1
  %v213 = vrot.slane %v136, 1
  %v214 = vsel %vm187, %v212, %v213
  %v215 = vrot.slane %v137, 1
  %v216 = vrot.slane %v138, 1
  %v217 = vsel %vm187, %v215, %v216
  %v218 = vrot.slane %v139, 1
  %v219 = vrot.slane %v140, 1
  %v220 = vsel %vm187, %v218, %v219
  %v221 = vrot.slane %v141, 1
  %v222 = vrot.slane %v142, 1
  %v223 = vsel %vm187, %v221, %v222
  %v224 = vrot.slane %v143, 1
  %v225 = vrot.slane %v144, 1
  %v226 = vsel %vm187, %v224, %v225
  %v227 = vrot.slane %v145, 1
  %v228 = vrot.slane %v146, 1
  %v229 = vsel %vm187, %v227, %v228
  %v230 = vrot.slane %v147, 1
  %v231 = vrot.slane %v148, 1
  %v232 = vsel %vm187, %v230, %v231
  %v233 = vrot.slane %v149, 1
  %v234 = vrot.slane %v150, 1
  %v235 = vsel %vm187, %v233, %v234
  %vm236 = vcmask 1045504
  %v237 = vrot.slane %v115, 2
  %v238 = vrot.slane %v116, 2
  %v239 = vsel %vm236, %v237, %v238
  %v240 = vrot.slane %v117, 2
  %v241 = vrot.slane %v118, 2
  %v242 = vsel %vm236, %v240, %v241
  %v243 = vrot.slane %v119, 2
  %v244 = vrot.slane %v120, 2
  %v245 = vsel %vm236, %v243, %v244
  %v246 = vrot.slane %v121, 2
  %v247 = vrot.slane %v122, 2
  %v248 = vsel %vm236, %v246, %v247
  %v249 = vrot.slane %v123, 2
  %v250 = vrot.slane %v124, 2
  %v251 = vsel %vm236, %v249, %v250
  %v252 = vrot.slane %v125, 2
  %v253 = vrot.slane %v126, 2
  %v254 = vsel %vm236, %v252, %v253
  %v255 = vrot.slane %v127, 2
  %v256 = vrot.slane %v128, 2
  %v257 = vsel %vm236, %v255, %v256
  %v258 = vrot.slane %v129, 2
  %v259 = vrot.slane %v130, 2
  %v260 = vsel %vm236, %v258, %v259
  %v261 = vrot.slane %v135, 2
  %v262 = vrot.slane %v136, 2
  %v263 = vsel %vm236, %v261, %v262
  %v264 = vrot.slane %v137, 2
  %v265 = vrot.slane %v138, 2
  %v266 = vsel %vm236, %v264, %v265
  %v267 = vrot.slane %v139, 2
  %v268 = vrot.slane %v140, 2
  %v269 = vsel %vm236, %v267, %v268
  %v270 = vrot.slane %v141, 2
  %v271 = vrot.slane %v142, 2
  %v272 = vsel %vm236, %v270, %v271
  %v273 = vrot.slane %v143, 2
  %v274 = vrot.slane %v144, 2
  %v275 = vsel %vm236, %v273, %v274
  %v276 = vrot.slane %v145, 2
  %v277 = vrot.slane %v146, 2
  %v278 = vsel %vm236, %v276, %v277
  %v279 = vrot.slane %v147, 2
  %v280 = vrot.slane %v148, 2
  %v281 = vsel %vm236, %v279, %v280
  %v282 = vrot.slane %v149, 2
  %v283 = vrot.slane %v150, 2
  %v284 = vsel %vm236, %v282, %v283
  %v289 = vrot.slane %v131, 1
  %v290 = vrot.slane %v132, 1
  %v291 = vsel %vm187, %v289, %v290
  %v292 = vrot.slane %v151, 1
  %v293 = vrot.slane %v152, 1
  %v294 = vsel %vm187, %v292, %v293
  %v311 = vrot.slane %v131, 2
  %v312 = vrot.slane %v132, 2
  %v313 = vsel %vm236, %v311, %v312
  %v314 = vrot.slane %v151, 2
  %v315 = vrot.slane %v152, 2
  %v316 = vsel %vm236, %v314, %v315
  %v321 = vrot.slane %v133, 1
  %v322 = vrot.slane %v134, 1
  %v323 = vsel %vm187, %v321, %v322
  %v324 = vrot.slane %v153, 1
  %v325 = vrot.slane %v154, 1
  %v326 = vsel %vm187, %v324, %v325
  %v327 = vrot.slane %v133, 2
  %v328 = vrot.slane %v134, 2
  %v329 = vsel %vm236, %v327, %v328
  %v330 = vrot.slane %v153, 2
  %v331 = vrot.slane %v154, 2
  %v332 = vsel %vm236, %v330, %v331
  %349 = vrot.lane.b32.xlu0 %v190, 32
  %v350 = vpop.permute.xlu0 %349
  %351 = vrot.lane.b32.xlu0 %v193, 32
  %v352 = vpop.permute.xlu0 %351
  %353 = vrot.lane.b32.xlu0 %v196, 32
  %v354 = vpop.permute.xlu0 %353
  %355 = vrot.lane.b32.xlu0 %v199, 32
  %v356 = vpop.permute.xlu0 %355
  %357 = vrot.lane.b32.xlu0 %v202, 32
  %v358 = vpop.permute.xlu0 %357
  %359 = vrot.lane.b32.xlu0 %v205, 32
  %v360 = vpop.permute.xlu0 %359
  %361 = vrot.lane.b32.xlu0 %v208, 32
  %v362 = vpop.permute.xlu0 %361
  %363 = vrot.lane.b32.xlu0 %v211, 32
  %v364 = vpop.permute.xlu0 %363
  %365 = vrot.lane.b32.xlu0 %v214, 32
  %v366 = vpop.permute.xlu0 %365
  %367 = vrot.lane.b32.xlu0 %v217, 32
  %v368 = vpop.permute.xlu0 %367
  %369 = vrot.lane.b32.xlu0 %v220, 32
  %v370 = vpop.permute.xlu0 %369
  %371 = vrot.lane.b32.xlu0 %v223, 32
  %v372 = vpop.permute.xlu0 %371
  %373 = vrot.lane.b32.xlu0 %v226, 32
  %v374 = vpop.permute.xlu0 %373
  %375 = vrot.lane.b32.xlu0 %v229, 32
  %v376 = vpop.permute.xlu0 %375
  %377 = vrot.lane.b32.xlu0 %v232, 32
  %v378 = vpop.permute.xlu0 %377
  %379 = vrot.lane.b32.xlu0 %v235, 32
  %v380 = vpop.permute.xlu0 %379
  %397 = vrot.lane.b32.xlu0 %v239, 64
  %v398 = vpop.permute.xlu0 %397
  %399 = vrot.lane.b32.xlu0 %v242, 64
  %v400 = vpop.permute.xlu0 %399
  %401 = vrot.lane.b32.xlu0 %v245, 64
  %v402 = vpop.permute.xlu0 %401
  %403 = vrot.lane.b32.xlu0 %v248, 64
  %v404 = vpop.permute.xlu0 %403
  %405 = vrot.lane.b32.xlu0 %v251, 64
  %v406 = vpop.permute.xlu0 %405
  %407 = vrot.lane.b32.xlu0 %v254, 64
  %v408 = vpop.permute.xlu0 %407
  %409 = vrot.lane.b32.xlu0 %v257, 64
  %v410 = vpop.permute.xlu0 %409
  %411 = vrot.lane.b32.xlu0 %v260, 64
  %v412 = vpop.permute.xlu0 %411
  %413 = vrot.lane.b32.xlu0 %v263, 64
  %v414 = vpop.permute.xlu0 %413
  %415 = vrot.lane.b32.xlu0 %v266, 64
  %v416 = vpop.permute.xlu0 %415
  %417 = vrot.lane.b32.xlu0 %v269, 64
  %v418 = vpop.permute.xlu0 %417
  %419 = vrot.lane.b32.xlu0 %v272, 64
  %v420 = vpop.permute.xlu0 %419
  %421 = vrot.lane.b32.xlu0 %v275, 64
  %v422 = vpop.permute.xlu0 %421
  %423 = vrot.lane.b32.xlu0 %v278, 64
  %v424 = vpop.permute.xlu0 %423
  %425 = vrot.lane.b32.xlu0 %v281, 64
  %v426 = vpop.permute.xlu0 %425
  %427 = vrot.lane.b32.xlu0 %v284, 64
  %v428 = vpop.permute.xlu0 %427
  %445 = vrot.lane.b32.xlu0 %v117, 96
  %v446 = vpop.permute.xlu0 %445
  %447 = vrot.lane.b32.xlu0 %v119, 96
  %v448 = vpop.permute.xlu0 %447
  %449 = vrot.lane.b32.xlu0 %v121, 96
  %v450 = vpop.permute.xlu0 %449
  %451 = vrot.lane.b32.xlu0 %v123, 96
  %v452 = vpop.permute.xlu0 %451
  %453 = vrot.lane.b32.xlu0 %v125, 96
  %v454 = vpop.permute.xlu0 %453
  %455 = vrot.lane.b32.xlu0 %v127, 96
  %v456 = vpop.permute.xlu0 %455
  %457 = vrot.lane.b32.xlu0 %v129, 96
  %v458 = vpop.permute.xlu0 %457
  %459 = vrot.lane.b32.xlu0 %v131, 96
  %v460 = vpop.permute.xlu0 %459
  %461 = vrot.lane.b32.xlu0 %v137, 96
  %v462 = vpop.permute.xlu0 %461
  %463 = vrot.lane.b32.xlu0 %v139, 96
  %v464 = vpop.permute.xlu0 %463
  %465 = vrot.lane.b32.xlu0 %v141, 96
  %v466 = vpop.permute.xlu0 %465
  %467 = vrot.lane.b32.xlu0 %v143, 96
  %v468 = vpop.permute.xlu0 %467
  %469 = vrot.lane.b32.xlu0 %v145, 96
  %v470 = vpop.permute.xlu0 %469
  %471 = vrot.lane.b32.xlu0 %v147, 96
  %v472 = vpop.permute.xlu0 %471
  %473 = vrot.lane.b32.xlu0 %v149, 96
  %v474 = vpop.permute.xlu0 %473
  %475 = vrot.lane.b32.xlu0 %v151, 96
  %v476 = vpop.permute.xlu0 %475
  %493 = vrot.lane.b32.xlu0 %v242, 32
  %v494 = vpop.permute.xlu0 %493
  %495 = vrot.lane.b32.xlu0 %v245, 32
  %v496 = vpop.permute.xlu0 %495
  %497 = vrot.lane.b32.xlu0 %v248, 32
  %v498 = vpop.permute.xlu0 %497
  %499 = vrot.lane.b32.xlu0 %v251, 32
  %v500 = vpop.permute.xlu0 %499
  %501 = vrot.lane.b32.xlu0 %v254, 32
  %v502 = vpop.permute.xlu0 %501
  %503 = vrot.lane.b32.xlu0 %v257, 32
  %v504 = vpop.permute.xlu0 %503
  %505 = vrot.lane.b32.xlu0 %v260, 32
  %v506 = vpop.permute.xlu0 %505
  %507 = vrot.lane.b32.xlu0 %v313, 32
  %v508 = vpop.permute.xlu0 %507
  %509 = vrot.lane.b32.xlu0 %v266, 32
  %v510 = vpop.permute.xlu0 %509
  %511 = vrot.lane.b32.xlu0 %v269, 32
  %v512 = vpop.permute.xlu0 %511
  %513 = vrot.lane.b32.xlu0 %v272, 32
  %v514 = vpop.permute.xlu0 %513
  %515 = vrot.lane.b32.xlu0 %v275, 32
  %v516 = vpop.permute.xlu0 %515
  %517 = vrot.lane.b32.xlu0 %v278, 32
  %v518 = vpop.permute.xlu0 %517
  %519 = vrot.lane.b32.xlu0 %v281, 32
  %v520 = vpop.permute.xlu0 %519
  %521 = vrot.lane.b32.xlu0 %v284, 32
  %v522 = vpop.permute.xlu0 %521
  %523 = vrot.lane.b32.xlu0 %v316, 32
  %v524 = vpop.permute.xlu0 %523
  %541 = vrot.lane.b32.xlu0 %v119, 64
  %v542 = vpop.permute.xlu0 %541
  %543 = vrot.lane.b32.xlu0 %v121, 64
  %v544 = vpop.permute.xlu0 %543
  %545 = vrot.lane.b32.xlu0 %v123, 64
  %v546 = vpop.permute.xlu0 %545
  %547 = vrot.lane.b32.xlu0 %v125, 64
  %v548 = vpop.permute.xlu0 %547
  %549 = vrot.lane.b32.xlu0 %v127, 64
  %v550 = vpop.permute.xlu0 %549
  %551 = vrot.lane.b32.xlu0 %v129, 64
  %v552 = vpop.permute.xlu0 %551
  %553 = vrot.lane.b32.xlu0 %v131, 64
  %v554 = vpop.permute.xlu0 %553
  %555 = vrot.lane.b32.xlu0 %v133, 64
  %v556 = vpop.permute.xlu0 %555
  %557 = vrot.lane.b32.xlu0 %v139, 64
  %v558 = vpop.permute.xlu0 %557
  %559 = vrot.lane.b32.xlu0 %v141, 64
  %v560 = vpop.permute.xlu0 %559
  %561 = vrot.lane.b32.xlu0 %v143, 64
  %v562 = vpop.permute.xlu0 %561
  %563 = vrot.lane.b32.xlu0 %v145, 64
  %v564 = vpop.permute.xlu0 %563
  %565 = vrot.lane.b32.xlu0 %v147, 64
  %v566 = vpop.permute.xlu0 %565
  %567 = vrot.lane.b32.xlu0 %v149, 64
  %v568 = vpop.permute.xlu0 %567
  %569 = vrot.lane.b32.xlu0 %v151, 64
  %v570 = vpop.permute.xlu0 %569
  %571 = vrot.lane.b32.xlu0 %v153, 64
  %v572 = vpop.permute.xlu0 %571
  %589 = vrot.lane.b32.xlu0 %v196, 96
  %v590 = vpop.permute.xlu0 %589
  %591 = vrot.lane.b32.xlu0 %v199, 96
  %v592 = vpop.permute.xlu0 %591
  %593 = vrot.lane.b32.xlu0 %v202, 96
  %v594 = vpop.permute.xlu0 %593
  %595 = vrot.lane.b32.xlu0 %v205, 96
  %v596 = vpop.permute.xlu0 %595
  %597 = vrot.lane.b32.xlu0 %v208, 96
  %v598 = vpop.permute.xlu0 %597
  %599 = vrot.lane.b32.xlu0 %v211, 96
  %v600 = vpop.permute.xlu0 %599
  %601 = vrot.lane.b32.xlu0 %v291, 96
  %v602 = vpop.permute.xlu0 %601
  %603 = vrot.lane.b32.xlu0 %v323, 96
  %v604 = vpop.permute.xlu0 %603
  %605 = vrot.lane.b32.xlu0 %v220, 96
  %v606 = vpop.permute.xlu0 %605
  %607 = vrot.lane.b32.xlu0 %v223, 96
  %v608 = vpop.permute.xlu0 %607
  %609 = vrot.lane.b32.xlu0 %v226, 96
  %v610 = vpop.permute.xlu0 %609
  %611 = vrot.lane.b32.xlu0 %v229, 96
  %v612 = vpop.permute.xlu0 %611
  %613 = vrot.lane.b32.xlu0 %v232, 96
  %v614 = vpop.permute.xlu0 %613
  %615 = vrot.lane.b32.xlu0 %v235, 96
  %v616 = vpop.permute.xlu0 %615
  %617 = vrot.lane.b32.xlu0 %v294, 96
  %v618 = vpop.permute.xlu0 %617
  %619 = vrot.lane.b32.xlu0 %v326, 96
  %v620 = vpop.permute.xlu0 %619
  %v637 = vsel %vm55, %v115, %v350
  %v638 = vsel %vm55, %v117, %v352
  %v639 = vsel %vm55, %v119, %v354
  %v640 = vsel %vm55, %v121, %v356
  %v641 = vsel %vm55, %v123, %v358
  %v642 = vsel %vm55, %v125, %v360
  %v643 = vsel %vm55, %v127, %v362
  %v644 = vsel %vm55, %v129, %v364
  %v645 = vsel %vm55, %v135, %v366
  %v646 = vsel %vm55, %v137, %v368
  %v647 = vsel %vm55, %v139, %v370
  %v648 = vsel %vm55, %v141, %v372
  %v649 = vsel %vm55, %v143, %v374
  %v650 = vsel %vm55, %v145, %v376
  %v651 = vsel %vm55, %v147, %v378
  %v652 = vsel %vm55, %v149, %v380
  %vm653 = vcmask 523264
  %v654 = vsel %vm653, %v637, %v398
  %v655 = vsel %vm653, %v638, %v400
  %v656 = vsel %vm653, %v639, %v402
  %v657 = vsel %vm653, %v640, %v404
  %v658 = vsel %vm653, %v641, %v406
  %v659 = vsel %vm653, %v642, %v408
  %v660 = vsel %vm653, %v643, %v410
  %v661 = vsel %vm653, %v644, %v412
  %v662 = vsel %vm653, %v645, %v414
  %v663 = vsel %vm653, %v646, %v416
  %v664 = vsel %vm653, %v647, %v418
  %v665 = vsel %vm653, %v648, %v420
  %v666 = vsel %vm653, %v649, %v422
  %v667 = vsel %vm653, %v650, %v424
  %v668 = vsel %vm653, %v651, %v426
  %v669 = vsel %vm653, %v652, %v428
  %vm670 = vcmask 785408
  %v671 = vsel %vm670, %v654, %v446
  %v672 = vsel %vm670, %v655, %v448
  %v673 = vsel %vm670, %v656, %v450
  %v674 = vsel %vm670, %v657, %v452
  %v675 = vsel %vm670, %v658, %v454
  %v676 = vsel %vm670, %v659, %v456
  %v677 = vsel %vm670, %v660, %v458
  %v678 = vsel %vm670, %v661, %v460
  %v679 = vsel %vm670, %v662, %v462
  %v680 = vsel %vm670, %v663, %v464
  %v681 = vsel %vm670, %v664, %v466
  %v682 = vsel %vm670, %v665, %v468
  %v683 = vsel %vm670, %v666, %v470
  %v684 = vsel %vm670, %v667, %v472
  %v685 = vsel %vm670, %v668, %v474
  %v686 = vsel %vm670, %v669, %v476
  %v687 = vsel %vm55, %v193, %v494
  %v688 = vsel %vm55, %v196, %v496
  %v689 = vsel %vm55, %v199, %v498
  %v690 = vsel %vm55, %v202, %v500
  %v691 = vsel %vm55, %v205, %v502
  %v692 = vsel %vm55, %v208, %v504
  %v693 = vsel %vm55, %v211, %v506
  %v694 = vsel %vm55, %v291, %v508
  %v695 = vsel %vm55, %v217, %v510
  %v696 = vsel %vm55, %v220, %v512
  %v697 = vsel %vm55, %v223, %v514
  %v698 = vsel %vm55, %v226, %v516
  %v699 = vsel %vm55, %v229, %v518
  %v700 = vsel %vm55, %v232, %v520
  %v701 = vsel %vm55, %v235, %v522
  %v702 = vsel %vm55, %v294, %v524
  %v703 = vsel %vm653, %v687, %v542
  %v704 = vsel %vm653, %v688, %v544
  %v705 = vsel %vm653, %v689, %v546
  %v706 = vsel %vm653, %v690, %v548
  %v707 = vsel %vm653, %v691, %v550
  %v708 = vsel %vm653, %v692, %v552
  %v709 = vsel %vm653, %v693, %v554
  %v710 = vsel %vm653, %v694, %v556
  %v711 = vsel %vm653, %v695, %v558
  %v712 = vsel %vm653, %v696, %v560
  %v713 = vsel %vm653, %v697, %v562
  %v714 = vsel %vm653, %v698, %v564
  %v715 = vsel %vm653, %v699, %v566
  %v716 = vsel %vm653, %v700, %v568
  %v717 = vsel %vm653, %v701, %v570
  %v718 = vsel %vm653, %v702, %v572
  %v719 = vsel %vm670, %v703, %v590
  %v720 = vsel %vm670, %v704, %v592
  %v721 = vsel %vm670, %v705, %v594
  %v722 = vsel %vm670, %v706, %v596
  %v723 = vsel %vm670, %v707, %v598
  %v724 = vsel %vm670, %v708, %v600
  %v725 = vsel %vm670, %v709, %v602
  %v726 = vsel %vm670, %v710, %v604
  %v727 = vsel %vm670, %v711, %v606
  %v728 = vsel %vm670, %v712, %v608
  %v729 = vsel %vm670, %v713, %v610
  %v730 = vsel %vm670, %v714, %v612
  %v731 = vsel %vm670, %v715, %v614
  %v732 = vsel %vm670, %v716, %v616
  %v733 = vsel %vm670, %v717, %v618
  %v734 = vsel %vm670, %v718, %v620
  %v735 = vpack.c.bf16 %v672, %v671
  %v736 = vpack.c.bf16 %v720, %v719
  %v737 = vpack.c.bf16 %v248, %v245
  %v738 = vpack.c.bf16 %v674, %v673
  %v739 = vpack.c.bf16 %v722, %v721
  %v740 = vpack.c.bf16 %v254, %v251
  %v741 = vpack.c.bf16 %v676, %v675
  %v742 = vpack.c.bf16 %v724, %v723
  %v743 = vpack.c.bf16 %v260, %v257
  %v744 = vpack.c.bf16 %v678, %v677
  %v745 = vpack.c.bf16 %v726, %v725
  %v746 = vpack.c.bf16 %v329, %v313
  %v747 = vpack.c.bf16 %v680, %v679
  %v748 = vpack.c.bf16 %v728, %v727
  %v749 = vpack.c.bf16 %v272, %v269
  %v750 = vpack.c.bf16 %v682, %v681
  %v751 = vpack.c.bf16 %v730, %v729
  %v752 = vpack.c.bf16 %v278, %v275
  %v753 = vpack.c.bf16 %v684, %v683
  %v754 = vpack.c.bf16 %v732, %v731
  %v755 = vpack.c.bf16 %v284, %v281
  %v756 = vpack.c.bf16 %v686, %v685
  %v757 = vpack.c.bf16 %v734, %v733
  %v758 = vpack.c.bf16 %v332, %v316
  %v759 = vld [vmem:[%s1] sm:$0xf]
  %v760 = vld [vmem:[%s1 + $0x4] sm:$0xf]
  %v761 = vld [vmem:[%s1 + $0x8] sm:$0xf]
  %v762 = vld [vmem:[%s1 + $0xc] sm:$0xf]
  %v763 = vld [vmem:[%s1 + $0x10] sm:$0xf]
  %v764 = vld [vmem:[%s1 + $0x14] sm:$0xf]
  %v765 = vld [vmem:[%s1 + $0x18] sm:$0xf]
  %v766 = vld [vmem:[%s1 + $0x1c] sm:$0xf]
  %v767 = vld [vmem:[%s1 + $0x20] sm:$0xf]
  %v768 = vld [vmem:[%s1 + $0x24] sm:$0xf]
  %v769 = vld [vmem:[%s1 + $0x28] sm:$0xf]
  %v770 = vld [vmem:[%s1 + $0x2c] sm:$0xf]
  %v771 = vld [vmem:[%s1 + $0x30] sm:$0xf]
  %v772 = vld [vmem:[%s1 + $0x34] sm:$0xf]
  %v773 = vld [vmem:[%s1 + $0x38] sm:$0xf]
  %v774 = vld [vmem:[%s1 + $0x3c] sm:$0xf]
  %v775 = vld [vmem:[%s1 + $0x40] sm:$0xf]
  %v776 = vld [vmem:[%s1 + $0x44] sm:$0xf]
  %v777 = vld [vmem:[%s1 + $0x48] sm:$0xf]
  %v778 = vld [vmem:[%s1 + $0x4c] sm:$0xf]
  %v779 = vld [vmem:[%s1 + $0x50] sm:$0xf]
  %v780 = vld [vmem:[%s1 + $0x54] sm:$0xf]
  %v781 = vld [vmem:[%s1 + $0x58] sm:$0xf]
  %v782 = vld [vmem:[%s1 + $0x5c] sm:$0xf]
  %v783 = vld [vmem:[%s1 + $0x60] sm:$0xf]
  %v784 = vld [vmem:[%s1 + $0x64] sm:$0xf]
  %v785 = vld [vmem:[%s1 + $0x68] sm:$0xf]
  %v786 = vld [vmem:[%s1 + $0x6c] sm:$0xf]
  %v787 = vld [vmem:[%s1 + $0x70] sm:$0xf]
  %v788 = vld [vmem:[%s1 + $0x74] sm:$0xf]
  %v789 = vld [vmem:[%s1 + $0x78] sm:$0xf]
  %v790 = vld [vmem:[%s1 + $0x7c] sm:$0xf]
  %v791 = vld [vmem:[%s1 + $0x80] sm:$0xf]
  %v792 = vld [vmem:[%s1 + $0x84] sm:$0xf]
  %v793 = vld [vmem:[%s1 + $0x88] sm:$0xf]
  %v794 = vld [vmem:[%s1 + $0x8c] sm:$0xf]
  %v831 = vunpack.c.l.b16 %v759
  %v832 = vunpack.c.l.b16 %v760
  %v833 = vunpack.c.l.b16 %v761
  %v834 = vunpack.c.l.b16 %v762
  %v835 = vunpack.c.l.b16 %v763
  %v836 = vunpack.c.l.b16 %v764
  %v837 = vunpack.c.l.b16 %v765
  %v838 = vunpack.c.l.b16 %v766
  %v839 = vunpack.c.l.b16 %v767
  %v840 = vunpack.c.l.b16 %v768
  %v841 = vunpack.c.l.b16 %v769
  %v842 = vunpack.c.l.b16 %v770
  %v843 = vunpack.c.l.b16 %v771
  %v844 = vunpack.c.l.b16 %v772
  %v845 = vunpack.c.l.b16 %v773
  %v846 = vunpack.c.l.b16 %v774
  %v847 = vunpack.c.l.b16 %v775
  %v848 = vunpack.c.l.b16 %v776
  %v849 = vunpack.c.l.b16 %v777
  %v850 = vunpack.c.l.b16 %v778
  %v851 = vunpack.c.l.b16 %v779
  %v852 = vunpack.c.l.b16 %v780
  %v853 = vunpack.c.l.b16 %v781
  %v854 = vunpack.c.l.b16 %v782
  %v855 = vunpack.c.l.b16 %v783
  %v856 = vunpack.c.l.b16 %v784
  %v857 = vunpack.c.l.b16 %v785
  %v858 = vunpack.c.l.b16 %v786
  %v859 = vunpack.c.l.b16 %v787
  %v860 = vunpack.c.l.b16 %v788
  %v861 = vunpack.c.l.b16 %v789
  %v862 = vunpack.c.l.b16 %v790
  %v863 = vunpack.c.l.b16 %v791
  %v864 = vunpack.c.l.b16 %v792
  %v865 = vunpack.c.l.b16 %v793
  %v866 = vunpack.c.l.b16 %v794
  %v867 = vpack.c.b16 %v832, %v831
  %v868 = vpack.c.b16 %v834, %v833
  %v869 = vpack.c.b16 %v836, %v835
  %v870 = vpack.c.b16 %v838, %v837
  %v871 = vpack.c.b16 %v840, %v839
  %v872 = vpack.c.b16 %v842, %v841
  %v873 = vpack.c.b16 %v844, %v843
  %v874 = vpack.c.b16 %v846, %v845
  %v875 = vpack.c.b16 %v848, %v847
  %v876 = vpack.c.b16 %v850, %v849
  %v877 = vpack.c.b16 %v852, %v851
  %v878 = vpack.c.b16 %v854, %v853
  %v879 = vpack.c.b16 %v856, %v855
  %v880 = vpack.c.b16 %v858, %v857
  %v881 = vpack.c.b16 %v860, %v859
  %v882 = vpack.c.b16 %v862, %v861
  %v883 = vpack.c.b16 %v864, %v863
  %v884 = vpack.c.b16 %v866, %v865
  %v904 = vsel %vm55, %v737, 0
  %v907 = vsel %vm55, %v740, 0
  %v910 = vsel %vm55, %v743, 0
  %v913 = vsel %vm55, %v746, 0
  %v916 = vsel %vm55, %v749, 0
  %v919 = vsel %vm55, %v752, 0
  %v922 = vsel %vm55, %v755, 0
  %v925 = vsel %vm55, %v758, 0
  %927 = vmatprep.subr.bf16.mxu0 0
  %928 = vmatpush1.bf16.msra.mxu0 %v867
  %929 = vmatprep.subr.bf16.mxu0 0
  %930 = vmatpush1.bf16.msra.mxu0 %v868
  %931 = vmatprep.subr.bf16.mxu0 0
  %932 = vmatpush1.bf16.msra.mxu0 %v869
  %933 = vmatprep.subr.bf16.mxu0 0
  %934 = vmatpush1.bf16.msra.mxu0 %v870
  %935 = vmatprep.subr.bf16.mxu0 0
  %936 = vmatpush1.bf16.msra.mxu0 %v871
  %937 = vmatprep.subr.bf16.mxu0 0
  %938 = vmatpush1.bf16.msra.mxu0 %v872
  %939 = vmatprep.subr.bf16.mxu0 0
  %940 = vmatpush1.bf16.msra.mxu0 %v873
  %941 = vmatprep.subr.bf16.mxu0 0
  %942 = vmatpush1.bf16.msra.mxu0 %v874
  %943 = vmatprep.subr.bf16.mxu0 0
  %944 = vmatpush1.bf16.msra.mxu0 %v875
  %945 = vmatprep.subr.bf16.mxu0 0
  %946 = vmatpush1.bf16.msra.mxu0 %v876
  %947 = vmatprep.subr.bf16.mxu0 0
  %948 = vmatpush1.bf16.msra.mxu0 %v877
  %949 = vmatprep.subr.bf16.mxu0 0
  %950 = vmatpush1.bf16.msra.mxu0 %v878
  %951 = vmatprep.subr.bf16.mxu0 0
  %952 = vmatpush1.bf16.msra.mxu0 %v879
  %953 = vmatprep.subr.bf16.mxu0 0
  %954 = vmatpush1.bf16.msra.mxu0 %v880
  %955 = vmatprep.subr.bf16.mxu0 0
  %956 = vmatpush1.bf16.msra.mxu0 %v881
  %957 = vmatprep.subr.bf16.mxu0 0
  %958 = vmatpush1.bf16.msra.mxu0 %v882
  %959 = vmatprep.mubr.bf16.mxu0 %v736
  %960 = vmatmul.mubr.bf16.gmra.mrb[0].mxu0 %v735
  %v961 = vpop.f32.mrb[0].mxu0
  %v962 = vadd.f32 0.0, %v961
  %v963 = vpop.f32.mrb[0].mxu0
  %v964 = vpop.f32.mrb[0].mxu0
  %v965 = vadd.f32 0.0, %v964
  %v966 = vpop.f32.mrb[0].mxu0
  %967 = vmatprep.mubr.bf16.mxu0 %v739
  %968 = vmatmul.mubr.bf16.gmra.mrb[0].mxu0 %v738
  %v969 = vpop.f32.mrb[0].mxu0
  %v970 = vadd.f32 0.0, %v969
  %v971 = vpop.f32.mrb[0].mxu0
  %v972 = vpop.f32.mrb[0].mxu0
  %v973 = vadd.f32 0.0, %v972
  %v974 = vpop.f32.mrb[0].mxu0
  %975 = vmatprep.mubr.bf16.mxu0 %v742
  %976 = vmatmul.mubr.bf16.gmra.mrb[0].mxu0 %v741
  %v977 = vpop.f32.mrb[0].mxu0
  %v978 = vadd.f32 0.0, %v977
  %v979 = vpop.f32.mrb[0].mxu0
  %v980 = vpop.f32.mrb[0].mxu0
  %v981 = vadd.f32 0.0, %v980
  %v982 = vpop.f32.mrb[0].mxu0
  %983 = vmatprep.mubr.bf16.mxu0 %v745
  %984 = vmatmul.mubr.bf16.gmra.mrb[0].mxu0 %v744
  %v985 = vpop.f32.mrb[0].mxu0
  %v986 = vadd.f32 0.0, %v985
  %v987 = vpop.f32.mrb[0].mxu0
  %v988 = vpop.f32.mrb[0].mxu0
  %v989 = vadd.f32 0.0, %v988
  %v990 = vpop.f32.mrb[0].mxu0
  %991 = vmatprep.mubr.bf16.mxu0 %v748
  %992 = vmatmul.mubr.bf16.gmra.mrb[0].mxu0 %v747
  %v993 = vpop.f32.mrb[0].mxu0
  %v994 = vadd.f32 0.0, %v993
  %v995 = vpop.f32.mrb[0].mxu0
  %v996 = vpop.f32.mrb[0].mxu0
  %v997 = vadd.f32 0.0, %v996
  %v998 = vpop.f32.mrb[0].mxu0
  %999 = vmatprep.mubr.bf16.mxu0 %v751
  %1000 = vmatmul.mubr.bf16.gmra.mrb[0].mxu0 %v750
  %v1001 = vpop.f32.mrb[0].mxu0
  %v1002 = vadd.f32 0.0, %v1001
  %v1003 = vpop.f32.mrb[0].mxu0
  %v1004 = vpop.f32.mrb[0].mxu0
  %v1005 = vadd.f32 0.0, %v1004
  %v1006 = vpop.f32.mrb[0].mxu0
  %1007 = vmatprep.mubr.bf16.mxu0 %v754
  %1008 = vmatmul.mubr.bf16.gmra.mrb[0].mxu0 %v753
  %v1009 = vpop.f32.mrb[0].mxu0
  %v1010 = vadd.f32 0.0, %v1009
  %v1011 = vpop.f32.mrb[0].mxu0
  %v1012 = vpop.f32.mrb[0].mxu0
  %v1013 = vadd.f32 0.0, %v1012
  %v1014 = vpop.f32.mrb[0].mxu0
  %1015 = vmatprep.mubr.bf16.mxu0 %v757
  %1016 = vmatmul.mubr.bf16.gmra.mrb[0].mxu0 %v756
  %v1017 = vpop.f32.mrb[0].mxu0
  %v1018 = vadd.f32 0.0, %v1017
  %v1019 = vpop.f32.mrb[0].mxu0
  %v1020 = vpop.f32.mrb[0].mxu0
  %v1021 = vadd.f32 0.0, %v1020
  %v1022 = vpop.f32.mrb[0].mxu0
  %1023 = vdwg.mxu0
  %1024 = vmatprep.subr.bf16.mxu0 0
  %1025 = vmatpush1.bf16.msra.mxu0 %v883
  %1026 = vmatprep.subr.bf16.mxu0 0
  %1027 = vmatpush1.bf16.msra.mxu0 %v884
  %1028 = vmatprep.subr.bf16.mxu0 0
  %1029 = vmatpush1.bf16.msra.mxu0 0
  %1030 = vmatprep.subr.bf16.mxu0 0
  %1031 = vmatpush1.bf16.msra.mxu0 0
  %1032 = vmatprep.subr.bf16.mxu0 0
  %1033 = vmatpush1.bf16.msra.mxu0 0
  %1034 = vmatprep.subr.bf16.mxu0 0
  %1035 = vmatpush1.bf16.msra.mxu0 0
  %1036 = vmatprep.subr.bf16.mxu0 0
  %1037 = vmatpush1.bf16.msra.mxu0 0
  %1038 = vmatprep.subr.bf16.mxu0 0
  %1039 = vmatpush1.bf16.msra.mxu0 0
  %1040 = vmatprep.subr.bf16.mxu0 0
  %1041 = vmatpush1.bf16.msra.mxu0 0
  %1042 = vmatprep.subr.bf16.mxu0 0
  %1043 = vmatpush1.bf16.msra.mxu0 0
  %1044 = vmatprep.subr.bf16.mxu0 0
  %1045 = vmatpush1.bf16.msra.mxu0 0
  %1046 = vmatprep.subr.bf16.mxu0 0
  %1047 = vmatpush1.bf16.msra.mxu0 0
  %1048 = vmatprep.subr.bf16.mxu0 0
  %1049 = vmatpush1.bf16.msra.mxu0 0
  %1050 = vmatprep.subr.bf16.mxu0 0
  %1051 = vmatpush1.bf16.msra.mxu0 0
  %1052 = vmatprep.subr.bf16.mxu0 0
  %1053 = vmatpush1.bf16.msra.mxu0 0
  %1054 = vmatprep.subr.bf16.mxu0 0
  %1055 = vmatpush1.bf16.msra.mxu0 0
  %1056 = vmatprep.mubr.bf16.mxu0 0
  %1057 = vmatmul.mubr.bf16.gmra.mrb[0].mxu0 %v904
  %v1058 = vpop.f32.mrb[0].mxu0
  %v1059 = vadd.f32 %v962, %v1058
  %v1060 = vpop.f32.mrb[0].mxu0
  %v1061 = vpop.f32.mrb[0].mxu0
  %v1062 = vadd.f32 %v965, %v1061
  %v1063 = vpop.f32.mrb[0].mxu0
  %1064 = vmatprep.mubr.bf16.mxu0 0
  %1065 = vmatmul.mubr.bf16.gmra.mrb[0].mxu0 %v907
  %v1066 = vpop.f32.mrb[0].mxu0
  %v1067 = vadd.f32 %v970, %v1066
  %v1068 = vpop.f32.mrb[0].mxu0
  %v1069 = vpop.f32.mrb[0].mxu0
  %v1070 = vadd.f32 %v973, %v1069
  %v1071 = vpop.f32.mrb[0].mxu0
  %1072 = vmatprep.mubr.bf16.mxu0 0
  %1073 = vmatmul.mubr.bf16.gmra.mrb[0].mxu0 %v910
  %v1074 = vpop.f32.mrb[0].mxu0
  %v1075 = vadd.f32 %v978, %v1074
  %v1076 = vpop.f32.mrb[0].mxu0
  %v1077 = vpop.f32.mrb[0].mxu0
  %v1078 = vadd.f32 %v981, %v1077
  %v1079 = vpop.f32.mrb[0].mxu0
  %1080 = vmatprep.mubr.bf16.mxu0 0
  %1081 = vmatmul.mubr.bf16.gmra.mrb[0].mxu0 %v913
  %v1082 = vpop.f32.mrb[0].mxu0
  %v1083 = vadd.f32 %v986, %v1082
  %v1084 = vpop.f32.mrb[0].mxu0
  %v1085 = vpop.f32.mrb[0].mxu0
  %v1086 = vadd.f32 %v989, %v1085
  %v1087 = vpop.f32.mrb[0].mxu0
  %1088 = vmatprep.mubr.bf16.mxu0 0
  %1089 = vmatmul.mubr.bf16.gmra.mrb[0].mxu0 %v916
  %v1090 = vpop.f32.mrb[0].mxu0
  %v1091 = vadd.f32 %v994, %v1090
  %v1092 = vpop.f32.mrb[0].mxu0
  %v1093 = vpop.f32.mrb[0].mxu0
  %v1094 = vadd.f32 %v997, %v1093
  %v1095 = vpop.f32.mrb[0].mxu0
  %1096 = vmatprep.mubr.bf16.mxu0 0
  %1097 = vmatmul.mubr.bf16.gmra.mrb[0].mxu0 %v919
  %v1098 = vpop.f32.mrb[0].mxu0
  %v1099 = vadd.f32 %v1002, %v1098
  %v1100 = vpop.f32.mrb[0].mxu0
  %v1101 = vpop.f32.mrb[0].mxu0
  %v1102 = vadd.f32 %v1005, %v1101
  %v1103 = vpop.f32.mrb[0].mxu0
  %1104 = vmatprep.mubr.bf16.mxu0 0
  %1105 = vmatmul.mubr.bf16.gmra.mrb[0].mxu0 %v922
  %v1106 = vpop.f32.mrb[0].mxu0
  %v1107 = vadd.f32 %v1010, %v1106
  %v1108 = vpop.f32.mrb[0].mxu0
  %v1109 = vpop.f32.mrb[0].mxu0
  %v1110 = vadd.f32 %v1013, %v1109
  %v1111 = vpop.f32.mrb[0].mxu0
  %1112 = vmatprep.mubr.bf16.mxu0 0
  %1113 = vmatmul.mubr.bf16.gmra.mrb[0].mxu0 %v925
  %v1114 = vpop.f32.mrb[0].mxu0
  %v1115 = vadd.f32 %v1018, %v1114
  %v1116 = vpop.f32.mrb[0].mxu0
  %v1117 = vpop.f32.mrb[0].mxu0
  %v1118 = vadd.f32 %v1021, %v1117
  %v1119 = vpop.f32.mrb[0].mxu0
  %1120 = vdwg.mxu0
  %v1121 = vpack.c.bf16 %v1062, %v1059
  %v1122 = vpack.c.bf16 %v1070, %v1067
  %v1123 = vpack.c.bf16 %v1078, %v1075
  %v1124 = vpack.c.bf16 %v1086, %v1083
  %v1125 = vpack.c.bf16 %v1094, %v1091
  %v1126 = vpack.c.bf16 %v1102, %v1099
  %v1127 = vpack.c.bf16 %v1110, %v1107
  %v1128 = vpack.c.bf16 %v1118, %v1115
  %v1137 = vunpack.c.l.b16 %v1121
  %v1138 = vunpack.c.h.b16 %v1121
  %v1139 = vunpack.c.l.b16 %v1122
  %v1140 = vunpack.c.h.b16 %v1122
  %v1141 = vunpack.c.l.b16 %v1123
  %v1142 = vunpack.c.h.b16 %v1123
  %v1143 = vunpack.c.l.b16 %v1124
  %v1144 = vunpack.c.h.b16 %v1124
  %v1145 = vunpack.c.l.b16 %v1125
  %v1146 = vunpack.c.h.b16 %v1125
  %v1147 = vunpack.c.l.b16 %v1126
  %v1148 = vunpack.c.h.b16 %v1126
  %v1149 = vunpack.c.l.b16 %v1127
  %v1150 = vunpack.c.h.b16 %v1127
  %v1151 = vunpack.c.l.b16 %v1128
  %v1152 = vunpack.c.h.b16 %v1128
  %v1153 = vpack.c.b16 %v1137, %v1137
  %v1154 = vpack.c.b16 %v1138, %v1138
  %v1155 = vpack.c.b16 %v1139, %v1139
  %v1156 = vpack.c.b16 %v1140, %v1140
  %v1157 = vpack.c.b16 %v1141, %v1141
  %v1158 = vpack.c.b16 %v1142, %v1142
  %v1159 = vpack.c.b16 %v1143, %v1143
  %v1160 = vpack.c.b16 %v1144, %v1144
  %v1161 = vpack.c.b16 %v1145, %v1145
  %v1162 = vpack.c.b16 %v1146, %v1146
  %v1163 = vpack.c.b16 %v1147, %v1147
  %v1164 = vpack.c.b16 %v1148, %v1148
  %v1165 = vpack.c.b16 %v1149, %v1149
  %v1166 = vpack.c.b16 %v1150, %v1150
  %v1167 = vpack.c.b16 %v1151, %v1151
  %v1168 = vpack.c.b16 %v1152, %v1152
  %vm1185 = vcmask 125952
  %1186 = vst.msk [vmem:[%s2] sm:$0xf] %vm1185, %v1153
  %1187 = vst.msk [vmem:[%s2 + $0x4] sm:$0xf] %vm1185, %v1154
  %1188 = vst.msk [vmem:[%s2 + $0x8] sm:$0xf] %vm1185, %v1155
  %1189 = vst.msk [vmem:[%s2 + $0xc] sm:$0xf] %vm1185, %v1156
  %1190 = vst.msk [vmem:[%s2 + $0x10] sm:$0xf] %vm1185, %v1157
  %1191 = vst.msk [vmem:[%s2 + $0x14] sm:$0xf] %vm1185, %v1158
  %1192 = vst.msk [vmem:[%s2 + $0x18] sm:$0xf] %vm1185, %v1159
  %1193 = vst.msk [vmem:[%s2 + $0x1c] sm:$0xf] %vm1185, %v1160
  %1194 = vst.msk [vmem:[%s2 + $0x20] sm:$0xf] %vm1185, %v1161
  %1195 = vst.msk [vmem:[%s2 + $0x24] sm:$0xf] %vm1185, %v1162
  %1196 = vst.msk [vmem:[%s2 + $0x28] sm:$0xf] %vm1185, %v1163
  %1197 = vst.msk [vmem:[%s2 + $0x2c] sm:$0xf] %vm1185, %v1164
  %1198 = vst.msk [vmem:[%s2 + $0x30] sm:$0xf] %vm1185, %v1165
  %1199 = vst.msk [vmem:[%s2 + $0x34] sm:$0xf] %vm1185, %v1166
  %1200 = vst.msk [vmem:[%s2 + $0x38] sm:$0xf] %vm1185, %v1167
  %1201 = vst.msk [vmem:[%s2 + $0x3c] sm:$0xf] %vm1185, %v1168
  %vm1202 = vcmask 130048
  %v1203 = vsel %vm1202, %v1059, 0.0
  %v1204 = vsel %vm1202, %v1062, 0.0
  %v1205 = vadd.f32 %v1203, %v1204
  %v1206 = vsel %vm1202, %v1067, 0.0
  %v1207 = vadd.f32 %v1205, %v1206
  %v1208 = vsel %vm1202, %v1070, 0.0
  %v1209 = vadd.f32 %v1207, %v1208
  %v1210 = vsel %vm1202, %v1075, 0.0
  %v1211 = vadd.f32 %v1209, %v1210
  %v1212 = vsel %vm1202, %v1078, 0.0
  %v1213 = vadd.f32 %v1211, %v1212
  %v1214 = vsel %vm1202, %v1083, 0.0
  %v1215 = vadd.f32 %v1213, %v1214
  %v1216 = vsel %vm1202, %v1086, 0.0
  %v1217 = vadd.f32 %v1215, %v1216
  %v1218 = vsel %vm1202, %v1091, 0.0
  %v1219 = vadd.f32 %v1217, %v1218
  %v1220 = vsel %vm1202, %v1094, 0.0
  %v1221 = vadd.f32 %v1219, %v1220
  %v1222 = vsel %vm1202, %v1099, 0.0
  %v1223 = vadd.f32 %v1221, %v1222
  %v1224 = vsel %vm1202, %v1102, 0.0
  %v1225 = vadd.f32 %v1223, %v1224
  %v1226 = vsel %vm1202, %v1107, 0.0
  %v1227 = vadd.f32 %v1225, %v1226
  %v1228 = vsel %vm1202, %v1110, 0.0
  %v1229 = vadd.f32 %v1227, %v1228
  %v1230 = vsel %vm1202, %v1115, 0.0
  %v1231 = vadd.f32 %v1229, %v1230
  %v1232 = vsel %vm1202, %v1118, 0.0
  %v1233 = vadd.f32 %v1231, %v1232
  %v1234 = vrot.slane %v1233, 4
  %v1235 = vadd.f32 %v1233, %v1234
  %v1236 = vrot.slane %v1235, 2
  %v1237 = vadd.f32 %v1235, %v1236
  %v1238 = vrot.slane %v1237, 1
  %v1239 = vadd.f32 %v1237, %v1238
  %v1240 = vmul.f32 %v1059, %v1059
  %v1241 = vmul.f32 %v1062, %v1062
  %v1242 = vmul.f32 %v1067, %v1067
  %v1243 = vmul.f32 %v1070, %v1070
  %v1244 = vmul.f32 %v1075, %v1075
  %v1245 = vmul.f32 %v1078, %v1078
  %v1246 = vmul.f32 %v1083, %v1083
  %v1247 = vmul.f32 %v1086, %v1086
  %v1248 = vmul.f32 %v1091, %v1091
  %v1249 = vmul.f32 %v1094, %v1094
  %v1250 = vmul.f32 %v1099, %v1099
  %v1251 = vmul.f32 %v1102, %v1102
  %v1252 = vmul.f32 %v1107, %v1107
  %v1253 = vmul.f32 %v1110, %v1110
  %v1254 = vmul.f32 %v1115, %v1115
  %v1255 = vmul.f32 %v1118, %v1118
  %v1256 = vsel %vm1202, %v1240, 0.0
  %v1257 = vsel %vm1202, %v1241, 0.0
  %v1258 = vadd.f32 %v1256, %v1257
  %v1259 = vsel %vm1202, %v1242, 0.0
  %v1260 = vadd.f32 %v1258, %v1259
  %v1261 = vsel %vm1202, %v1243, 0.0
  %v1262 = vadd.f32 %v1260, %v1261
  %v1263 = vsel %vm1202, %v1244, 0.0
  %v1264 = vadd.f32 %v1262, %v1263
  %v1265 = vsel %vm1202, %v1245, 0.0
  %v1266 = vadd.f32 %v1264, %v1265
  %v1267 = vsel %vm1202, %v1246, 0.0
  %v1268 = vadd.f32 %v1266, %v1267
  %v1269 = vsel %vm1202, %v1247, 0.0
  %v1270 = vadd.f32 %v1268, %v1269
  %v1271 = vsel %vm1202, %v1248, 0.0
  %v1272 = vadd.f32 %v1270, %v1271
  %v1273 = vsel %vm1202, %v1249, 0.0
  %v1274 = vadd.f32 %v1272, %v1273
  %v1275 = vsel %vm1202, %v1250, 0.0
  %v1276 = vadd.f32 %v1274, %v1275
  %v1277 = vsel %vm1202, %v1251, 0.0
  %v1278 = vadd.f32 %v1276, %v1277
  %v1279 = vsel %vm1202, %v1252, 0.0
  %v1280 = vadd.f32 %v1278, %v1279
  %v1281 = vsel %vm1202, %v1253, 0.0
  %v1282 = vadd.f32 %v1280, %v1281
  %v1283 = vsel %vm1202, %v1254, 0.0
  %v1284 = vadd.f32 %v1282, %v1283
  %v1285 = vsel %vm1202, %v1255, 0.0
  %v1286 = vadd.f32 %v1284, %v1285
  %v1287 = vrot.slane %v1286, 4
  %v1288 = vadd.f32 %v1286, %v1287
  %v1289 = vrot.slane %v1288, 2
  %v1290 = vadd.f32 %v1288, %v1289
  %v1291 = vrot.slane %v1290, 1
  %v1292 = vadd.f32 %v1290, %v1291
  %vm1293 = vcmask 1040384
  %v1294 = vsel %vm1293, %v1239, %v1292
  %vm1295 = vcmask 123904
  %1296 = vst.msk [vmem:[%s3] sm:$0x3] %vm1295, %v1294
  // Predicated region
  $region10: #{residual_stack_forward.6} parent=0 // pred_check
    _
  $region11: #{residual_stack_forward.6} parent=0 // pred_check_branch
    %1298 = sbr.rel (0) target = $region13
  $region12: #{residual_stack_forward.6} parent=0 // pred_region
    _
  $region13: #{residual_stack_forward.6} parent=0 // pred_fallthru
    _
  // Predicated region
  $region14: #{residual_stack_forward.6} parent=0 // pred_check
    _
  $region15: #{residual_stack_forward.6} parent=0 // pred_check_branch
    %1300 = sbr.rel (0) target = $region17
  $region16: #{residual_stack_forward.6} parent=0 // pred_region
    _
  $region17: #{residual_stack_forward.6} parent=0 // pred_fallthru
    _
  // Predicated region
  $region18: #{residual_stack_forward.6} parent=0 // pred_check
    _
  $region19: #{residual_stack_forward.6} parent=0 // pred_check_branch
    %1302 = sbr.rel (0) target = $region21
  $region20: #{residual_stack_forward.6} parent=0 // pred_region
    _
  $region21: #{residual_stack_forward.6} parent=0 // pred_fallthru
    _
  // Predicated region
  $region22: #{residual_stack_forward.6} parent=0 // pred_check
    _
  $region23: #{residual_stack_forward.6} parent=0 // pred_check_branch
    %1304 = sbr.rel (0) target = $region25
  $region24: #{residual_stack_forward.6} parent=0 // pred_region
    _
  $region25: #{residual_stack_forward.6} parent=0 // pred_fallthru
    _

</llo_original>
